<compile_context>
chip_gen: v7x
topology: tpu7x:2x2x1
jax: 0.10.0
libtpu: 0.0.40
codegen_flags: <defaults>
</compile_context>

<pallas_src>
import functools

import jax
import jax.numpy as jnp
from jax import lax
from jax.experimental import pallas as pl
from jax.experimental.pallas import tpu as pltpu


def _round_up(x, m):
    return (x + m - 1) // m * m


def _make_blaze_kernel(tap_specs, res_tap_ids, cin, cout, m_pad):
    """tap_specs: tuple of (plane_idx, lane_start) static slices, one per
    3x3 tap (t = 3*ky + kx).  Must match the fused-weight layout."""

    def kernel(planes_ref, wf_ref, bf_ref, mask_ref, out_ref):
        # planes_ref: (P, Cin, Lext)   activation planes (compute dtype, bf16)
        # wf_ref    : (9, Cout, Cin)   fused dw*pw weights (compute dtype)
        # bf_ref    : (Cout, 1)        fused bias (f32)
        # mask_ref  : (1, M_pad)       1.0 on valid output columns, 0.0 on junk
        # out_ref   : (Cout, M_pad)    out dtype (bf16 by default), lane dense

        def tap(t):
            p, s = tap_specs[t]
            return planes_ref[p, :, s:s + m_pad]          # (Cin, M_pad)

        # Per-tap matmul accumulation: 9 bf16 x bf16 MXU matmuls into one f32
        # accumulator.  No 9x im2col buffer is ever materialized, so VMEM
        # stays ~1x the activation slab even at large feature maps.
        acc = None
        for t in range(len(tap_specs)):
            d = jnp.dot(wf_ref[t], tap(t),
                        preferred_element_type=jnp.float32)  # (Cout, M_pad)
            acc = d if acc is None else acc + d
        acc = acc + bf_ref[...]

        # Residual straight from the taps (f32 for the skip add):
        #   stride=1: center tap == x ; stride=2: max of 4 phase planes == pool.
        res = tap(res_tap_ids[0]).astype(jnp.float32)
        for t in res_tap_ids[1:]:
            res = jnp.maximum(res, tap(t).astype(jnp.float32))
        if cout > cin:
            # Channel-pad of the residual: zero-extend to Cout rows so the
            # store below is a single unmasked full-width store.
            res = jnp.concatenate(
                [res, jnp.zeros((cout - cin, m_pad), jnp.float32)], axis=0)

        y = jnp.maximum(acc + res, 0.0) * mask_ref[...]   # zero junk columns
        out_ref[...] = y.astype(out_ref.dtype)

    return kernel


def init_blaze_block_params(key, in_channels, out_channels, kernel_size=3):
    """Deterministic synthetic parameters (same shapes as the nn.Module)."""
    k1, k2, k3, k4 = jax.random.split(key, 4)
    w_dw = jax.random.normal(k1, (in_channels, 1, kernel_size, kernel_size),
                             jnp.float32) * 0.2
    b_dw = jax.random.normal(k2, (in_channels,), jnp.float32) * 0.1
    w_pw = jax.random.normal(k3, (out_channels, in_channels, 1, 1),
                             jnp.float32) * 0.2
    b_pw = jax.random.normal(k4, (out_channels,), jnp.float32) * 0.1
    return dict(w_dw=w_dw, b_dw=b_dw, w_pw=w_pw, b_pw=b_pw)


@functools.partial(
    jax.jit,
    static_argnames=("kernel_size", "stride", "compute_dtype", "out_dtype",
                     "crop"))
def blaze_block_forward(x_nchw, params, *, kernel_size=3, stride=1,
                        compute_dtype=jnp.bfloat16, out_dtype=None,
                        crop=True):
    """Pallas implementation of BlazeBlock.forward.  Input is NCHW.

    crop=True  -> returns NCHW (N, Cout, Hout, Wout), matching the module.
    crop=False -> returns the lane-dense padded slab (N, Cout, M_pad) with
                  junk columns already zeroed (chainable, no extra HBM copy).
    """
    assert kernel_size == 3, "kernel specialized for the module default k=3"
    assert stride in (1, 2)
    if out_dtype is None:
        out_dtype = compute_dtype

    w_dw = params["w_dw"].astype(jnp.float32)     # (Cin, 1, 3, 3)
    b_dw = params["b_dw"].astype(jnp.float32)     # (Cin,)
    w_pw = params["w_pw"].astype(jnp.float32)     # (Cout, Cin, 1, 1)
    b_pw = params["b_pw"].astype(jnp.float32)     # (Cout,)
    cin, cout = w_dw.shape[0], w_pw.shape[0]
    assert cout >= cin, "BlazeBlock kernel assumes out_channels >= in_channels"
    n, cx, h_dim, w_dim = x_nchw.shape
    assert cx == cin
    x = x_nchw.astype(jnp.float32)
    kk = kernel_size * kernel_size

    if stride == 1:
        # SAME padding; compute on the flattened padded grid of width Wp.
        # Output column m = r*Wp + c maps to conv output (y=r, x=c-1);
        # columns c==0 / c==Wp-1 are junk (zeroed in-kernel by the mask).
        hp = jnp.pad(x, ((0, 0), (0, 0), (1, 1), (1, 1)))   # (N,Cin,H+2,W+2)
        wp = w_dim + 2
        hout, wout = h_dim, w_dim
        m_out = hout * wp
        m_pad = _round_up(m_out, 128)
        pre = 1                                    # covers the (0,0) tap offset of -1
        tap_specs = tuple((0, pre + ky * wp + (kx - 1))
                          for ky in range(3) for kx in range(3))
        res_tap_ids = (4,)                         # center tap == x (residual)
        flat = hp.reshape(n, cin, -1)
        max_start = max(s for _, s in tap_specs)
        lext = _round_up(max(pre + flat.shape[-1], max_start + m_pad), 128)
        planes = jnp.pad(flat, ((0, 0), (0, 0),
                                (pre, lext - pre - flat.shape[-1])))[:, None]
        row_w, col0, ncols = wp, 1, wout
    else:
        assert h_dim % 2 == 0 and w_dim % 2 == 0, (
            "stride=2 BlazeBlock assumes even H/W (as the PyTorch module does)")
        # pad bottom/right by 2, then phase-decimate into 4 planes so stride-2
        # taps are static shifts; 2x2 maxpool residual = max of the 4 planes.
        hp = jnp.pad(x, ((0, 0), (0, 0), (0, 2), (0, 2)))   # (N,Cin,H+2,W+2)
        hout, wout = h_dim // 2, w_dim // 2
        wq = wout + 1
        m_out = hout * wq
        m_pad = _round_up(m_out, 128)
        tap_specs = tuple(((ky % 2) * 2 + (kx % 2), (ky // 2) * wq + (kx // 2))
                          for ky in range(3) for kx in range(3))
        res_tap_ids = (0, 1, 3, 4)                 # 4 offset-0 taps == maxpool
        phases = jnp.stack([hp[:, :, a::2, b::2].reshape(n, cin, -1)
                            for a in (0, 1) for b in (0, 1)], axis=1)
        max_start = max(s for _, s in tap_specs)
        lext = _round_up(max(phases.shape[-1], max_start + m_pad), 128)
        planes = jnp.pad(phases, ((0, 0), (0, 0), (0, 0),
                                  (0, lext - phases.shape[-1])))
        row_w, col0, ncols = wq, 0, wout

    planes = planes.astype(compute_dtype)          # bf16 HBM traffic by default
    n_planes = planes.shape[1]

    # Fused weights W[t, o, c] = w_pw[o, c] * w_dw[c, t]  (t = 3*ky + kx),
    # so depthwise + pointwise collapse into per-tap MXU matmuls.
    pww = w_pw[:, :, 0, 0]                                             # (Cout, Cin)
    dww = jnp.transpose(w_dw[:, 0, :, :], (1, 2, 0)).reshape(kk, cin)  # (9, Cin)
    wf = (pww[None, :, :] * dww[:, None, :]).astype(compute_dtype)     # (9,Cout,Cin)
    bf = (pww @ b_dw + b_pw).reshape(cout, 1)                          # f32

    # Lane mask: 1.0 on valid output columns, 0.0 on junk / lane padding.
    cols = jnp.arange(m_pad)
    c = cols % row_w
    mask = ((cols < hout * row_w) & (c >= col0) & (c < col0 + ncols))
    mask = mask.astype(jnp.float32)[None, :]                           # (1, M_pad)

    kernel = _make_blaze_kernel(tap_specs, res_tap_ids, cin, cout, m_pad)
    out = pl.pallas_call(
        kernel,
        out_shape=jax.ShapeDtypeStruct((n, cout, m_pad), out_dtype),
        grid=(n,),
        in_specs=[
            # Whole (planes, Cin, Lext) slab per batch element: read from HBM
            # once, stays VMEM-resident while the 9 taps are sliced from it.
            pl.BlockSpec((None, n_planes, cin, lext), lambda b: (b, 0, 0, 0)),
            pl.BlockSpec((kk, cout, cin), lambda b: (0, 0, 0)),
            pl.BlockSpec((cout, 1), lambda b: (0, 0)),
            pl.BlockSpec((1, m_pad), lambda b: (0, 0)),
        ],
        out_specs=pl.BlockSpec((None, cout, m_pad), lambda b: (b, 0, 0)),
        compiler_params=pltpu.CompilerParams(
            dimension_semantics=("parallel",),     # batch shards across TCs (v7x)
            vmem_limit_bytes=48 * 1024 * 1024),    # <= ~48 MiB: safe on v7x 64 MiB
    )(planes, wf, bf, mask)

    if not crop:
        return out      # (N, Cout, M_pad), junk columns already zeroed

    # Crop to NCHW (inside the same jit region as the pallas_call).
    out = out[:, :, :hout * row_w].reshape(n, cout, hout, row_w)
    return out[:, :, :, col0:col0 + ncols]


def blaze_block_reference(x_nchw, params, *, kernel_size=3, stride=1):
    """Pure-JAX reference mirroring the PyTorch forward (NCHW, f32)."""
    w_dw, b_dw = params["w_dw"], params["b_dw"]
    w_pw, b_pw = params["w_pw"], params["b_pw"]
    cin = w_dw.shape[0]
    cout = w_pw.shape[0]
    channel_pad = cout - cin

    x = x_nchw.astype(jnp.float32)
    if stride == 2:
        h = jnp.pad(x, ((0, 0), (0, 0), (0, 2), (0, 2)))
        n, c, hh, ww = x.shape
        x = x[:, :, :(hh // 2) * 2, :(ww // 2) * 2].reshape(
            n, c, hh // 2, 2, ww // 2, 2).max(axis=(3, 5))
        pad = [(0, 0), (0, 0)]
    else:
        h = x
        p = (kernel_size - 1) // 2
        pad = [(p, p), (p, p)]

    dn = ("NCHW", "OIHW", "NCHW")
    y = lax.conv_general_dilated(h, w_dw, (stride, stride), pad,
                                 dimension_numbers=dn,
                                 feature_group_count=cin)
    y = y + b_dw[None, :, None, None]
    y = lax.conv_general_dilated(y, w_pw, (1, 1), [(0, 0), (0, 0)],
                                 dimension_numbers=dn)
    y = y + b_pw[None, :, None, None]
    if channel_pad > 0:
        x = jnp.pad(x, ((0, 0), (0, channel_pad), (0, 0), (0, 0)))
    return jnp.maximum(y + x, 0.0)


if __name__ == "__main__":
    key = jax.random.PRNGKey(0)
    kx_key, kp_key = jax.random.split(key)

    N, H, W = 2, 16, 16
    configs = [
        (8, 16, 1),   # channel expansion, stride 1 (module defaults)
        (8, 16, 2),   # channel expansion, stride 2 (downsample + maxpool residual)
        (8, 8, 1),    # no channel pad
    ]
    ok = True
    for idx, (cin, cout, stride) in enumerate(configs):
        kp = jax.random.fold_in(kp_key, idx)
        kx = jax.random.fold_in(kx_key, idx)
        params = init_blaze_block_params(kp, cin, cout, kernel_size=3)
        x = jax.random.normal(kx, (N, cin, H, W), jnp.float32)
        ref = jax.block_until_ready(
            blaze_block_reference(x, params, kernel_size=3, stride=stride))
        # f32 path: tight check of the algorithm; bf16 path: fast path, looser
        # tolerance accounts for bf16 activation/weight/output rounding.
        for dtype, tol in ((jnp.float32, 1e-4), (jnp.bfloat16, 5e-2)):
            out = jax.block_until_ready(
                blaze_block_forward(x, params, kernel_size=3, stride=stride,
                                    compute_dtype=dtype))
            out = jnp.asarray(out, jnp.float32)
            if out.shape != ref.shape:
                ok = False
            elif not bool(jnp.allclose(out, ref, atol=tol, rtol=tol)):
                ok = False

    print("KERNEL_OK" if ok else "KERNEL_MISMATCH")
</pallas_src>

<mosaic_0001>
module attributes {stable_mosaic.version = 11 : i64} {
  func.func @kernel(%arg0: i32, %arg1: memref<1x1x8x512xf32, #tpu.memory_space<vmem>>, %arg2: memref<9x16x8xf32, #tpu.memory_space<vmem>>, %arg3: memref<16x1xf32, #tpu.memory_space<vmem>>, %arg4: memref<1x384xf32, #tpu.memory_space<vmem>>, %arg5: memref<1x16x384xf32, #tpu.memory_space<vmem>>) attributes {dimension_semantics = [#tpu.dimension_semantics<parallel>], iteration_bounds = array<i64: 2>, scalar_prefetch = 0 : i64, scratch_operands = 0 : i64, tpu.core_type = #tpu.core_type<tc>, window_params = [{transform_indices = @transform_0, window_bounds = array<i64: 1, 1, 8, 512>}, {pipeline_mode = #tpu.pipeline_mode<synchronous>, transform_indices = @transform_1, window_bounds = array<i64: 9, 16, 8>}, {pipeline_mode = #tpu.pipeline_mode<synchronous>, transform_indices = @transform_2, window_bounds = array<i64: 16, 1>}, {pipeline_mode = #tpu.pipeline_mode<synchronous>, transform_indices = @transform_3, window_bounds = array<i64: 1, 384>}, {transform_indices = @transform_4, window_bounds = array<i64: 1, 16, 384>}]} {
    %c0 = arith.constant 0 : index
    %c0_0 = arith.constant 0 : index
    %c0_1 = arith.constant 0 : index
    %0 = vector.load %arg2[%c0, %c0_0, %c0_1] : memref<9x16x8xf32, #tpu.memory_space<vmem>>, vector<1x16x8xf32>
    %1 = vector.shape_cast %0 : vector<1x16x8xf32> to vector<16x8xf32>
    %c0_2 = arith.constant 0 : index
    %c0_3 = arith.constant 0 : index
    %c0_4 = arith.constant 0 : index
    %c0_5 = arith.constant 0 : index
    %2 = vector.load %arg1[%c0_2, %c0_3, %c0_4, %c0_5] : memref<1x1x8x512xf32, #tpu.memory_space<vmem>>, vector<1x1x8x384xf32>
    %3 = vector.shape_cast %2 : vector<1x1x8x384xf32> to vector<8x384xf32>
    %cst = arith.constant dense<0.000000e+00> : vector<16x384xf32>
    %4 = tpu.matmul %1, %3, %cst {dimension_numbers = #tpu.dot_dimension_numbers<[1], [0], [0], [1], [0, 0, 1, 1], [], []>} : vector<16x8xf32>, vector<8x384xf32>, vector<16x384xf32> -> vector<16x384xf32>
    %c1 = arith.constant 1 : index
    %c0_6 = arith.constant 0 : index
    %c0_7 = arith.constant 0 : index
    %5 = vector.load %arg2[%c1, %c0_6, %c0_7] : memref<9x16x8xf32, #tpu.memory_space<vmem>>, vector<1x16x8xf32>
    %6 = vector.shape_cast %5 : vector<1x16x8xf32> to vector<16x8xf32>
    %c0_8 = arith.constant 0 : index
    %c0_9 = arith.constant 0 : index
    %c0_10 = arith.constant 0 : index
    %c1_11 = arith.constant 1 : index
    %7 = vector.load %arg1[%c0_8, %c0_9, %c0_10, %c1_11] : memref<1x1x8x512xf32, #tpu.memory_space<vmem>>, vector<1x1x8x384xf32>
    %8 = vector.shape_cast %7 : vector<1x1x8x384xf32> to vector<8x384xf32>
    %cst_12 = arith.constant dense<0.000000e+00> : vector<16x384xf32>
    %9 = tpu.matmul %6, %8, %cst_12 {dimension_numbers = #tpu.dot_dimension_numbers<[1], [0], [0], [1], [0, 0, 1, 1], [], []>} : vector<16x8xf32>, vector<8x384xf32>, vector<16x384xf32> -> vector<16x384xf32>
    %10 = arith.addf %4, %9 : vector<16x384xf32>
    %c2 = arith.constant 2 : index
    %c0_13 = arith.constant 0 : index
    %c0_14 = arith.constant 0 : index
    %11 = vector.load %arg2[%c2, %c0_13, %c0_14] : memref<9x16x8xf32, #tpu.memory_space<vmem>>, vector<1x16x8xf32>
    %12 = vector.shape_cast %11 : vector<1x16x8xf32> to vector<16x8xf32>
    %c0_15 = arith.constant 0 : index
    %c0_16 = arith.constant 0 : index
    %c0_17 = arith.constant 0 : index
    %c2_18 = arith.constant 2 : index
    %13 = vector.load %arg1[%c0_15, %c0_16, %c0_17, %c2_18] : memref<1x1x8x512xf32, #tpu.memory_space<vmem>>, vector<1x1x8x384xf32>
    %14 = vector.shape_cast %13 : vector<1x1x8x384xf32> to vector<8x384xf32>
    %cst_19 = arith.constant dense<0.000000e+00> : vector<16x384xf32>
    %15 = tpu.matmul %12, %14, %cst_19 {dimension_numbers = #tpu.dot_dimension_numbers<[1], [0], [0], [1], [0, 0, 1, 1], [], []>} : vector<16x8xf32>, vector<8x384xf32>, vector<16x384xf32> -> vector<16x384xf32>
    %16 = arith.addf %10, %15 : vector<16x384xf32>
    %c3 = arith.constant 3 : index
    %c0_20 = arith.constant 0 : index
    %c0_21 = arith.constant 0 : index
    %17 = vector.load %arg2[%c3, %c0_20, %c0_21] : memref<9x16x8xf32, #tpu.memory_space<vmem>>, vector<1x16x8xf32>
    %18 = vector.shape_cast %17 : vector<1x16x8xf32> to vector<16x8xf32>
    %c0_22 = arith.constant 0 : index
    %c0_23 = arith.constant 0 : index
    %c0_24 = arith.constant 0 : index
    %c18 = arith.constant 18 : index
    %19 = vector.load %arg1[%c0_22, %c0_23, %c0_24, %c18] : memref<1x1x8x512xf32, #tpu.memory_space<vmem>>, vector<1x1x8x384xf32>
    %20 = vector.shape_cast %19 : vector<1x1x8x384xf32> to vector<8x384xf32>
    %cst_25 = arith.constant dense<0.000000e+00> : vector<16x384xf32>
    %21 = tpu.matmul %18, %20, %cst_25 {dimension_numbers = #tpu.dot_dimension_numbers<[1], [0], [0], [1], [0, 0, 1, 1], [], []>} : vector<16x8xf32>, vector<8x384xf32>, vector<16x384xf32> -> vector<16x384xf32>
    %22 = arith.addf %16, %21 : vector<16x384xf32>
    %c4 = arith.constant 4 : index
    %c0_26 = arith.constant 0 : index
    %c0_27 = arith.constant 0 : index
    %23 = vector.load %arg2[%c4, %c0_26, %c0_27] : memref<9x16x8xf32, #tpu.memory_space<vmem>>, vector<1x16x8xf32>
    %24 = vector.shape_cast %23 : vector<1x16x8xf32> to vector<16x8xf32>
    %c0_28 = arith.constant 0 : index
    %c0_29 = arith.constant 0 : index
    %c0_30 = arith.constant 0 : index
    %c19 = arith.constant 19 : index
    %25 = vector.load %arg1[%c0_28, %c0_29, %c0_30, %c19] : memref<1x1x8x512xf32, #tpu.memory_space<vmem>>, vector<1x1x8x384xf32>
    %26 = vector.shape_cast %25 : vector<1x1x8x384xf32> to vector<8x384xf32>
    %cst_31 = arith.constant dense<0.000000e+00> : vector<16x384xf32>
    %27 = tpu.matmul %24, %26, %cst_31 {dimension_numbers = #tpu.dot_dimension_numbers<[1], [0], [0], [1], [0, 0, 1, 1], [], []>} : vector<16x8xf32>, vector<8x384xf32>, vector<16x384xf32> -> vector<16x384xf32>
    %28 = arith.addf %22, %27 : vector<16x384xf32>
    %c5 = arith.constant 5 : index
    %c0_32 = arith.constant 0 : index
    %c0_33 = arith.constant 0 : index
    %29 = vector.load %arg2[%c5, %c0_32, %c0_33] : memref<9x16x8xf32, #tpu.memory_space<vmem>>, vector<1x16x8xf32>
    %30 = vector.shape_cast %29 : vector<1x16x8xf32> to vector<16x8xf32>
    %c0_34 = arith.constant 0 : index
    %c0_35 = arith.constant 0 : index
    %c0_36 = arith.constant 0 : index
    %c20 = arith.constant 20 : index
    %31 = vector.load %arg1[%c0_34, %c0_35, %c0_36, %c20] : memref<1x1x8x512xf32, #tpu.memory_space<vmem>>, vector<1x1x8x384xf32>
    %32 = vector.shape_cast %31 : vector<1x1x8x384xf32> to vector<8x384xf32>
    %cst_37 = arith.constant dense<0.000000e+00> : vector<16x384xf32>
    %33 = tpu.matmul %30, %32, %cst_37 {dimension_numbers = #tpu.dot_dimension_numbers<[1], [0], [0], [1], [0, 0, 1, 1], [], []>} : vector<16x8xf32>, vector<8x384xf32>, vector<16x384xf32> -> vector<16x384xf32>
    %34 = arith.addf %28, %33 : vector<16x384xf32>
    %c6 = arith.constant 6 : index
    %c0_38 = arith.constant 0 : index
    %c0_39 = arith.constant 0 : index
    %35 = vector.load %arg2[%c6, %c0_38, %c0_39] : memref<9x16x8xf32, #tpu.memory_space<vmem>>, vector<1x16x8xf32>
    %36 = vector.shape_cast %35 : vector<1x16x8xf32> to vector<16x8xf32>
    %c0_40 = arith.constant 0 : index
    %c0_41 = arith.constant 0 : index
    %c0_42 = arith.constant 0 : index
    %c36 = arith.constant 36 : index
    %37 = vector.load %arg1[%c0_40, %c0_41, %c0_42, %c36] : memref<1x1x8x512xf32, #tpu.memory_space<vmem>>, vector<1x1x8x384xf32>
    %38 = vector.shape_cast %37 : vector<1x1x8x384xf32> to vector<8x384xf32>
    %cst_43 = arith.constant dense<0.000000e+00> : vector<16x384xf32>
    %39 = tpu.matmul %36, %38, %cst_43 {dimension_numbers = #tpu.dot_dimension_numbers<[1], [0], [0], [1], [0, 0, 1, 1], [], []>} : vector<16x8xf32>, vector<8x384xf32>, vector<16x384xf32> -> vector<16x384xf32>
    %40 = arith.addf %34, %39 : vector<16x384xf32>
    %c7 = arith.constant 7 : index
    %c0_44 = arith.constant 0 : index
    %c0_45 = arith.constant 0 : index
    %41 = vector.load %arg2[%c7, %c0_44, %c0_45] : memref<9x16x8xf32, #tpu.memory_space<vmem>>, vector<1x16x8xf32>
    %42 = vector.shape_cast %41 : vector<1x16x8xf32> to vector<16x8xf32>
    %c0_46 = arith.constant 0 : index
    %c0_47 = arith.constant 0 : index
    %c0_48 = arith.constant 0 : index
    %c37 = arith.constant 37 : index
    %43 = vector.load %arg1[%c0_46, %c0_47, %c0_48, %c37] : memref<1x1x8x512xf32, #tpu.memory_space<vmem>>, vector<1x1x8x384xf32>
    %44 = vector.shape_cast %43 : vector<1x1x8x384xf32> to vector<8x384xf32>
    %cst_49 = arith.constant dense<0.000000e+00> : vector<16x384xf32>
    %45 = tpu.matmul %42, %44, %cst_49 {dimension_numbers = #tpu.dot_dimension_numbers<[1], [0], [0], [1], [0, 0, 1, 1], [], []>} : vector<16x8xf32>, vector<8x384xf32>, vector<16x384xf32> -> vector<16x384xf32>
    %46 = arith.addf %40, %45 : vector<16x384xf32>
    %c8 = arith.constant 8 : index
    %c0_50 = arith.constant 0 : index
    %c0_51 = arith.constant 0 : index
    %47 = vector.load %arg2[%c8, %c0_50, %c0_51] : memref<9x16x8xf32, #tpu.memory_space<vmem>>, vector<1x16x8xf32>
    %48 = vector.shape_cast %47 : vector<1x16x8xf32> to vector<16x8xf32>
    %c0_52 = arith.constant 0 : index
    %c0_53 = arith.constant 0 : index
    %c0_54 = arith.constant 0 : index
    %c38 = arith.constant 38 : index
    %49 = vector.load %arg1[%c0_52, %c0_53, %c0_54, %c38] : memref<1x1x8x512xf32, #tpu.memory_space<vmem>>, vector<1x1x8x384xf32>
    %50 = vector.shape_cast %49 : vector<1x1x8x384xf32> to vector<8x384xf32>
    %cst_55 = arith.constant dense<0.000000e+00> : vector<16x384xf32>
    %51 = tpu.matmul %48, %50, %cst_55 {dimension_numbers = #tpu.dot_dimension_numbers<[1], [0], [0], [1], [0, 0, 1, 1], [], []>} : vector<16x8xf32>, vector<8x384xf32>, vector<16x384xf32> -> vector<16x384xf32>
    %52 = arith.addf %46, %51 : vector<16x384xf32>
    %c0_56 = arith.constant 0 : index
    %c0_57 = arith.constant 0 : index
    %53 = vector.load %arg3[%c0_56, %c0_57] : memref<16x1xf32, #tpu.memory_space<vmem>>, vector<16x1xf32>
    %54 = vector.broadcast %53 : vector<16x1xf32> to vector<16x384xf32>
    %55 = arith.addf %52, %54 : vector<16x384xf32>
    %c0_58 = arith.constant 0 : index
    %c0_59 = arith.constant 0 : index
    %c0_60 = arith.constant 0 : index
    %c19_61 = arith.constant 19 : index
    %56 = vector.load %arg1[%c0_58, %c0_59, %c0_60, %c19_61] : memref<1x1x8x512xf32, #tpu.memory_space<vmem>>, vector<1x1x8x384xf32>
    %57 = vector.shape_cast %56 : vector<1x1x8x384xf32> to vector<8x384xf32>
    %cst_62 = arith.constant 0.000000e+00 : f32
    %58 = vector.broadcast %cst_62 : f32 to vector<8x384xf32>
    %59 = tpu.concatenate %57, %58 in 0 : vector<8x384xf32>, vector<8x384xf32> -> vector<16x384xf32>
    %60 = arith.addf %55, %59 : vector<16x384xf32>
    %cst_63 = arith.constant 0.000000e+00 : f32
    %61 = vector.broadcast %cst_63 : f32 to vector<16x384xf32>
    %62 = arith.maximumf %60, %61 : vector<16x384xf32>
    %c0_64 = arith.constant 0 : index
    %c0_65 = arith.constant 0 : index
    %63 = vector.load %arg4[%c0_64, %c0_65] : memref<1x384xf32, #tpu.memory_space<vmem>>, vector<1x384xf32>
    %64 = vector.broadcast %63 : vector<1x384xf32> to vector<16x384xf32>
    %65 = arith.mulf %62, %64 : vector<16x384xf32>
    %c0_66 = arith.constant 0 : index
    %c0_67 = arith.constant 0 : index
    %c0_68 = arith.constant 0 : index
    %66 = vector.load %arg5[%c0_66, %c0_67, %c0_68] : memref<1x16x384xf32, #tpu.memory_space<vmem>>, vector<1x16x384xf32>
    %67 = vector.shape_cast %66 : vector<1x16x384xf32> to vector<16x384xf32>
    %68 = vector.shape_cast %65 : vector<16x384xf32> to vector<1x16x384xf32>
    tpu.vector_store %arg5[%c0_66, %c0_67, %c0_68], %68 {strides = array<i32>} : memref<1x16x384xf32, #tpu.memory_space<vmem>>, vector<1x16x384xf32>,
    return
  }
  func.func @transform_0(%arg0: i32) -> (i32, i32, i32, i32) {
    %c0_i32 = arith.constant 0 : i32
    %c0_i32_0 = arith.constant 0 : i32
    %c0_i32_1 = arith.constant 0 : i32
    %c0_i32_2 = arith.constant 0 : i32
    return %arg0, %c0_i32, %c0_i32_0, %c0_i32_1 : i32, i32, i32, i32
  }
  func.func @transform_1(%arg0: i32) -> (i32, i32, i32) {
    %c0_i32 = arith.constant 0 : i32
    %c0_i32_0 = arith.constant 0 : i32
    %c0_i32_1 = arith.constant 0 : i32
    %c0_i32_2 = arith.constant 0 : i32
    return %c0_i32, %c0_i32_0, %c0_i32_1 : i32, i32, i32
  }
  func.func @transform_2(%arg0: i32) -> (i32, i32) {
    %c0_i32 = arith.constant 0 : i32
    %c0_i32_0 = arith.constant 0 : i32
    %c0_i32_1 = arith.constant 0 : i32
    return %c0_i32, %c0_i32_0 : i32, i32
  }
  func.func @transform_3(%arg0: i32) -> (i32, i32) {
    %c0_i32 = arith.constant 0 : i32
    %c0_i32_0 = arith.constant 0 : i32
    %c0_i32_1 = arith.constant 0 : i32
    return %c0_i32, %c0_i32_0 : i32, i32
  }
  func.func @transform_4(%arg0: i32) -> (i32, i32, i32) {
    %c0_i32 = arith.constant 0 : i32
    %c0_i32_0 = arith.constant 0 : i32
    %c0_i32_1 = arith.constant 0 : i32
    return %arg0, %c0_i32, %c0_i32_0 : i32, i32, i32
  }
}

</mosaic_0001>

<llo_original>
// kernel: mul.11
$region0: #{mul.11}
  %s0 = inlined_call_operand.vmem [shape: f32[3,3,8], index: 0, kind: input, shape index: {}]
  %s1 = inlined_call_operand.vmem [shape: f32[9,8], index: 1, kind: output, shape index: {}]
  $region1: #{mul.11} parent=0
    #allocation0 [shape = 'u8[12288]{0}', space=vmem, size = 0x3000, scoped, tag = 'scoped mem for input reshape']
    %s3 = sshllo.u32 0, 4
    %s4 = smul.addr 4, 2
    %s5 = scalar_lea.vmem %s0, %s4
    %v6 = vld [vmem:[%s5] sm:%s3]
    %s7 = scalar_lea.vmem [#allocation0], 16
    %8 = vst [vmem:[%s7] sm:%s3] %v6
    %s9 = scalar_lea.vmem %s0, 4
    %v10 = vld [vmem:[%s9] sm:%s3]
    %s11 = scalar_lea.vmem [#allocation0], 8
    %12 = vst [vmem:[%s11] sm:%s3] %v10
    %v13 = vld [vmem:[%s0] sm:%s3]
    %14 = vst [vmem:[#allocation0] sm:%s3] %v13
    %v15 = vld [vmem:[#allocation0] sm:$0x7]
    %vm16 = vcmask 64512
    %17 = vst.msk [vmem:[%s1] sm:$0x7] %vm16, %v15
    %s18 = scalar_lea.vmem [#allocation0], 8
    %v19 = vld [vmem:[%s18] sm:$0x7]
    %vm20 = vcmask 64512
    %s21 = scalar_lea.vmem %s1, 3
    %22 = vst.msk [vmem:[%s21] sm:$0x7] %vm20, %v19
    %s23 = scalar_lea.vmem [#allocation0], 16
    %v24 = vld [vmem:[%s23] sm:$0x7]
    %vm25 = vcmask 64512
    %s26 = scalar_lea.vmem %s1, 6
    %27 = vst.msk [vmem:[%s26] sm:$0x7] %vm25, %v24

// kernel: blaze_block_forward.1
$region0: #{blaze_block_forward.1}
  #allocation0 [shape = 'u32[]', space=smem, size = 0x4, offset = 0x4, fixed_abs, tag = 'smem constant byte address 0x4 - core index']
  #allocation1 [shape = 'u32[144,128]{1,0:T(1,128)}', space=vmem, size = 0x12000, scoped, tag = 'internal scratch']
  %s0 = inlined_call_operand.vmem [shape: f32[2,1,8,512], index: 0, kind: input, shape index: {}]
  %s1 = inlined_call_operand.vmem [shape: f32[9,16,8], index: 1, kind: input, shape index: {}]
  %s2 = inlined_call_operand.vmem [shape: f32[16,1], index: 2, kind: input, shape index: {}]
  %s3 = inlined_call_operand.vmem [shape: f32[1,384], index: 3, kind: input, shape index: {}]
  %s4 = inlined_call_operand.vmem [shape: f32[2,16,384], index: 4, kind: output, shape index: {}]
  %s5 = sld [smem:[#allocation0]]
  $region49: #{blaze_block_forward.1} parent=0
    _
  %s7 = ssub.s32 1, %s5
  %s8 = scalar_select 0, %s7, %s5
  loop: start=0, step=1, limit=4
  $region2: #{blaze_block_forward.1} parent=0 // loop_pre_header
    _
  $region3: #{blaze_block_forward.1} parent=0 // loop_header
    %s10 = sphi 0, %s14
    %p11 = scmp.ge.s32.totalorder %s10, 4
    %s20 = sphi 0, %s22
    %s23 = sphi 0, %s20
    %s24 = sphi 0, %s23
    %s40 = sphi 0, %s24
    %s44 = sphi 0, %s44
    %s46 = sphi 0, %s44
    %s47 = sphi 0, %s46
    %s61 = sphi 0, %s47
    %s65 = sphi 0, %s65
    %s67 = sphi 0, %s65
    %s68 = sphi 0, %s67
    %s82 = sphi 0, %s68
    %s86 = sphi 0, %s86
    %s88 = sphi 0, %s86
    %s89 = sphi 0, %s88
    %s103 = sphi 0, %s89
    %s109 = sphi 0, %s111
    %s112 = sphi 0, %s109
    %s113 = sphi 0, %s112
    %s129 = sphi 0, %s113
  $region4: #{blaze_block_forward.1} parent=0 // loop_header_branch
    %13 = sbr.rel (%p11) target = $region8
  $region5: #{blaze_block_forward.1} parent=0 // loop_body
    %s15 = ssub.s32 %s10, 1
    %s16 = ssub.s32 %s10, 2
    %s17 = sadd.s32 %s10, 1
    %s18 = ssub.s32 %s10, %s17
    %p19 = scmp.eq.s32.totalorder %s18, 0
    %s21 = sadd.s32 %s20, 1
    %s22 = scalar_select %p19, %s20, %s21
    %p25 = pneg %p19
    %p26 = scmp.eq.s32.totalorder %s10, 1
    %p27 = por %p25, %p26
    %p28 = scmp.ne.s32.totalorder %s20, %s23
    %p29 = scmp.eq.s32.totalorder %s10, 0
    %p30 = por %p28, %p29
    %p31 = scmp.ne.s32.totalorder %s20, %s23
    %p32 = scmp.eq.s32.totalorder %s15, 1
    %p33 = por %p31, %p32
    %p34 = scmp.ne.s32.totalorder %s23, %s24
    %p35 = scmp.eq.s32.totalorder %s15, 0
    %p36 = por %p34, %p35
    %p37 = scmp.ne.s32.totalorder %s23, %s24
    %p38 = scmp.eq.s32.totalorder %s16, 1
    %p39 = por %p37, %p38
    %p41 = scmp.ne.s32.totalorder %s24, %s40
    %p42 = scmp.eq.s32.totalorder %s16, 0
    %p43 = por %p41, %p42
    %s45 = sadd.s32 %s44, 1
    %p48 = scmp.eq.s32.totalorder %s10, 1
    %p49 = scmp.ne.s32.totalorder %s44, %s46
    %p50 = scmp.eq.s32.totalorder %s10, 0
    %p51 = por %p49, %p50
    %p52 = scmp.ne.s32.totalorder %s44, %s46
    %p53 = scmp.eq.s32.totalorder %s15, 1
    %p54 = por %p52, %p53
    %p55 = scmp.ne.s32.totalorder %s46, %s47
    %p56 = scmp.eq.s32.totalorder %s15, 0
    %p57 = por %p55, %p56
    %p58 = scmp.ne.s32.totalorder %s46, %s47
    %p59 = scmp.eq.s32.totalorder %s16, 1
    %p60 = por %p58, %p59
    %p62 = scmp.ne.s32.totalorder %s47, %s61
    %p63 = scmp.eq.s32.totalorder %s16, 0
    %p64 = por %p62, %p63
    %s66 = sadd.s32 %s65, 1
    %p69 = scmp.eq.s32.totalorder %s10, 1
    %p70 = scmp.ne.s32.totalorder %s65, %s67
    %p71 = scmp.eq.s32.totalorder %s10, 0
    %p72 = por %p70, %p71
    %p73 = scmp.ne.s32.totalorder %s65, %s67
    %p74 = scmp.eq.s32.totalorder %s15, 1
    %p75 = por %p73, %p74
    %p76 = scmp.ne.s32.totalorder %s67, %s68
    %p77 = scmp.eq.s32.totalorder %s15, 0
    %p78 = por %p76, %p77
    %p79 = scmp.ne.s32.totalorder %s67, %s68
    %p80 = scmp.eq.s32.totalorder %s16, 1
    %p81 = por %p79, %p80
    %p83 = scmp.ne.s32.totalorder %s68, %s82
    %p84 = scmp.eq.s32.totalorder %s16, 0
    %p85 = por %p83, %p84
    %s87 = sadd.s32 %s86, 1
    %p90 = scmp.eq.s32.totalorder %s10, 1
    %p91 = scmp.ne.s32.totalorder %s86, %s88
    %p92 = scmp.eq.s32.totalorder %s10, 0
    %p93 = por %p91, %p92
    %p94 = scmp.ne.s32.totalorder %s86, %s88
    %p95 = scmp.eq.s32.totalorder %s15, 1
    %p96 = por %p94, %p95
    %p97 = scmp.ne.s32.totalorder %s88, %s89
    %p98 = scmp.eq.s32.totalorder %s15, 0
    %p99 = por %p97, %p98
    %p100 = scmp.ne.s32.totalorder %s88, %s89
    %p101 = scmp.eq.s32.totalorder %s16, 1
    %p102 = por %p100, %p101
    %p104 = scmp.ne.s32.totalorder %s89, %s103
    %p105 = scmp.eq.s32.totalorder %s16, 0
    %p106 = por %p104, %p105
    %s107 = ssub.s32 %s10, %s17
    %p108 = scmp.eq.s32.totalorder %s107, 0
    %s110 = sadd.s32 %s109, 1
    %s111 = scalar_select %p108, %s109, %s110
    %p114 = pneg %p108
    %p115 = scmp.eq.s32.totalorder %s10, 1
    %p116 = por %p114, %p115
    %p117 = scmp.ne.s32.totalorder %s109, %s112
    %p118 = scmp.eq.s32.totalorder %s10, 0
    %p119 = por %p117, %p118
    %p120 = scmp.ne.s32.totalorder %s109, %s112
    %p121 = scmp.eq.s32.totalorder %s15, 1
    %p122 = por %p120, %p121
    %p123 = scmp.ne.s32.totalorder %s112, %s113
    %p124 = scmp.eq.s32.totalorder %s15, 0
    %p125 = por %p123, %p124
    %p126 = scmp.ne.s32.totalorder %s112, %s113
    %p127 = scmp.eq.s32.totalorder %s16, 1
    %p128 = por %p126, %p127
    %p130 = scmp.ne.s32.totalorder %s113, %s129
    %p131 = scmp.eq.s32.totalorder %s16, 0
    %p132 = por %p130, %p131
    %p133 = scmp.le.s32.totalorder 1, %s10
    %p134 = scmp.lt.s32.totalorder %s10, 3
    %p135 = pnand %p133, %p134
    %p136 = pneg %p135
    // Predicated region
    $region9: #{blaze_block_forward.1} parent=5 // pred_check
      _
    $region10: #{blaze_block_forward.1} parent=5 // pred_check_branch
      %138 = sbr.rel (%p135) target = $region12
    $region11: #{blaze_block_forward.1} parent=5 // pred_region
      %s139 = ssub.s32 %s10, 1
      // Predicated region
      $region13: #{blaze_block_forward.1} parent=11 // pred_check
        %p140 = pneg %p57
      $region14: #{blaze_block_forward.1} parent=11 // pred_check_branch
        %142 = sbr.rel (%p140) target = $region16
      $region15: #{blaze_block_forward.1} parent=11 // pred_region
        _
      $region16: #{blaze_block_forward.1} parent=11 // pred_fallthru
        _
      // Predicated region
      $region17: #{blaze_block_forward.1} parent=11 // pred_check
        %p143 = pneg %p78
      $region18: #{blaze_block_forward.1} parent=11 // pred_check_branch
        %145 = sbr.rel (%p143) target = $region20
      $region19: #{blaze_block_forward.1} parent=11 // pred_region
        _
      $region20: #{blaze_block_forward.1} parent=11 // pred_fallthru
        _
      // Predicated region
      $region21: #{blaze_block_forward.1} parent=11 // pred_check
        %p146 = pneg %p99
      $region22: #{blaze_block_forward.1} parent=11 // pred_check_branch
        %148 = sbr.rel (%p146) target = $region24
      $region23: #{blaze_block_forward.1} parent=11 // pred_region
        _
      $region24: #{blaze_block_forward.1} parent=11 // pred_fallthru
        _
    $region12: #{blaze_block_forward.1} parent=5 // pred_fallthru
      _
    %p149 = scmp.lt.s32.totalorder %s10, 2
    // Predicated region
    $region25: #{blaze_block_forward.1} parent=5 // pred_check
      %p150 = pneg %p149
    $region26: #{blaze_block_forward.1} parent=5 // pred_check_branch
      %152 = sbr.rel (%p150) target = $region28
    $region27: #{blaze_block_forward.1} parent=5 // pred_region
      // Predicated region
      $region29: #{blaze_block_forward.1} parent=27 // pred_check
        %p153 = pneg %p30
      $region30: #{blaze_block_forward.1} parent=27 // pred_check_branch
        %155 = sbr.rel (%p153) target = $region32
      $region31: #{blaze_block_forward.1} parent=27 // pred_region
        %p156 = scmp.lt.s32.totalorder %s10, 1
        %s157 = scalar_select %p156, %s10, 1
        %s158 = smul.addr %s157, 4
        %s159 = smul.addr %s158, 8
        %s160 = scalar_lea.vmem %s0, %s159
      $region32: #{blaze_block_forward.1} parent=27 // pred_fallthru
        _
    $region28: #{blaze_block_forward.1} parent=5 // pred_fallthru
      _
    %p161 = scmp.le.s32.totalorder 1, %s10
    %p162 = scmp.lt.s32.totalorder %s10, 3
    %p163 = pnand %p161, %p162
    %p164 = pneg %p163
    // Predicated region
    $region33: #{blaze_block_forward.1} parent=5 // pred_check
      _
    $region34: #{blaze_block_forward.1} parent=5 // pred_check_branch
      %166 = sbr.rel (%p163) target = $region36
    $region35: #{blaze_block_forward.1} parent=5 // pred_region
      %s167 = ssub.s32 %s10, 1
      %p168 = scmp.lt.s32.totalorder %s15, 1
      %s169 = scalar_select %p168, %s15, 1
      %s170 = smul.addr %s169, 4
      %s171 = smul.addr %s170, 8
      %s172 = scalar_lea.vmem %s0, %s171
      %p173 = pneg %p36
      %p174 = pneg %p33
      %p175 = pneg %p57
      %p176 = pneg %p54
      %p177 = pneg %p78
      %p178 = pneg %p75
      %p179 = pneg %p99
      %p180 = pneg %p96
      %p181 = pneg %p125
      %p182 = pneg %p122
      %p183 = scmp.lt.s32.totalorder %s15, 1
      %s184 = scalar_select %p183, %s15, 1
      %s185 = smul.addr %s184, 6
      %s186 = smul.addr %s185, 8
      %s187 = scalar_lea.vmem %s4, %s186
      %p188 = scmp.lt.s32.totalorder %s15, 1
      %s189 = scalar_select %p188, %s15, 1
      %s190 = smul.addr %s189, 4
      %s191 = smul.addr %s190, 8
      %s192 = scalar_lea.vmem %s0, %s191
      %p193 = scmp.lt.s32.totalorder %s15, 1
      %s194 = scalar_select %p193, %s15, 1
      %s195 = smul.addr %s194, 6
      %s196 = smul.addr %s195, 8
      %s197 = scalar_lea.vmem %s4, %s196
      %v198 = vld [vmem:[%s1] sm:$0xff]
      %v199 = vld [vmem:[%s1 + $0x8] sm:$0xff]
      %v200 = vld [vmem:[%s192] sm:$0xff]
      %v201 = vld [vmem:[%s192 + $0x8] sm:$0xff]
      %v202 = vld [vmem:[%s192 + $0x10] sm:$0xff]
      %s203 = scalar_lea.vmem %s1, 16
      %v204 = vld [vmem:[%s203] sm:$0xff]
      %v205 = vld [vmem:[%s203 + $0x8] sm:$0xff]
      %v206 = vld [vmem:[%s192] sm:$0xff]
      %v207 = vld [vmem:[%s192 + $0x8] sm:$0xff]
      %v208 = vld [vmem:[%s192 + $0x10] sm:$0xff]
      %v209 = vld [vmem:[%s192 + $0x18] sm:$0xff]
      %214 = vrot.lane.b32.xlu0 %v206, 127
      %v215 = vpop.permute.xlu0 %214
      %216 = vrot.lane.b32.xlu0 %v207, 127
      %v217 = vpop.permute.xlu0 %216
      %218 = vrot.lane.b32.xlu0 %v208, 127
      %v219 = vpop.permute.xlu0 %218
      %220 = vrot.lane.b32.xlu0 %v209, 127
      %v221 = vpop.permute.xlu0 %220
      %vm222 = vcmask 1039360
      %v223 = vsel %vm222, %v215, %v217
      %v224 = vsel %vm222, %v217, %v219
      %v225 = vsel %vm222, %v219, %v221
      %vm229 = vcmask 64512
      %v231 = vsel %vm229, %v204, 0
      %v234 = vsel %vm229, %v205, 0
      %236 = vmatprep.subr.mxu0 %v224
      %237 = vmatpush1.msra.mxu0 %v223
      %238 = vmatprep.subr.mxu0 0.0
      %239 = vmatpush1.msra.mxu0 0.0
      %240 = vmatprep.subr.mxu0 0.0
      %241 = vmatpush1.msra.mxu0 0.0
      %242 = vmatprep.subr.mxu0 0.0
      %243 = vmatpush1.msra.mxu0 0.0
      %244 = vmatprep.subr.mxu0 0.0
      %245 = vmatpush1.msra.mxu0 0.0
      %246 = vmatprep.subr.mxu0 0.0
      %247 = vmatpush1.msra.mxu0 0.0
      %248 = vmatprep.subr.mxu0 0.0
      %249 = vmatpush1.msra.mxu0 0.0
      %250 = vmatprep.subr.mxu0 0.0
      %251 = vmatpush1.msra.mxu0 0.0
      %252 = vmatprep.subr.mxu0 0.0
      %253 = vmatpush1.msra.mxu0 0.0
      %254 = vmatprep.subr.mxu0 0.0
      %255 = vmatpush1.msra.mxu0 0.0
      %256 = vmatprep.subr.mxu0 0.0
      %257 = vmatpush1.msra.mxu0 0.0
      %258 = vmatprep.subr.mxu0 0.0
      %259 = vmatpush1.msra.mxu0 0.0
      %260 = vmatprep.subr.mxu0 0.0
      %261 = vmatpush1.msra.mxu0 0.0
      %262 = vmatprep.subr.mxu0 0.0
      %263 = vmatpush1.msra.mxu0 0.0
      %264 = vmatprep.subr.mxu0 0.0
      %265 = vmatpush1.msra.mxu0 0.0
      %266 = vmatprep.subr.mxu0 0.0
      %267 = vmatpush1.msra.mxu0 0.0
      %268 = vmatprep.subr.mxu0 0.0
      %269 = vmatpush1.msra.mxu0 0.0
      %270 = vmatprep.subr.mxu0 0.0
      %271 = vmatpush1.msra.mxu0 0.0
      %272 = vmatprep.subr.mxu0 0.0
      %273 = vmatpush1.msra.mxu0 0.0
      %274 = vmatprep.subr.mxu0 0.0
      %275 = vmatpush1.msra.mxu0 0.0
      %276 = vmatprep.subr.mxu0 0.0
      %277 = vmatpush1.msra.mxu0 0.0
      %278 = vmatprep.subr.mxu0 0.0
      %279 = vmatpush1.msra.mxu0 0.0
      %280 = vmatprep.subr.mxu0 0.0
      %281 = vmatpush1.msra.mxu0 0.0
      %282 = vmatprep.subr.mxu0 0.0
      %283 = vmatpush1.msra.mxu0 0.0
      %284 = vmatprep.subr.mxu0 0.0
      %285 = vmatpush1.msra.mxu0 0.0
      %286 = vmatprep.subr.mxu0 0.0
      %287 = vmatpush1.msra.mxu0 0.0
      %288 = vmatprep.subr.mxu0 0.0
      %289 = vmatpush1.msra.mxu0 0.0
      %290 = vmatprep.subr.mxu0 0.0
      %291 = vmatpush1.msra.mxu0 0.0
      %292 = vmatprep.subr.mxu0 0.0
      %293 = vmatpush1.msra.mxu0 0.0
      %294 = vmatprep.subr.mxu0 0.0
      %295 = vmatpush1.msra.mxu0 0.0
      %296 = vmatprep.subr.mxu0 0.0
      %297 = vmatpush1.msra.mxu0 0.0
      %298 = vmatprep.subr.mxu0 0.0
      %299 = vmatpush1.msra.mxu0 0.0
      %300 = vmatprep.mubr.f32.mxu0 0.0
      %301 = vmatmul.mubr.f32.gmra.mrb[0].mxu0 %v231
      %v302 = vpop.f32.mrb[0].mxu0
      %v303 = vadd.f32 0.0, %v302
      %v304 = vpop.f32.mrb[0].mxu0
      %v305 = vadd.f32 0.0, %v304
      %306 = vmatprep.mubr.f32.mxu0 0.0
      %307 = vmatmul.mubr.f32.gmra.mrb[0].mxu0 %v234
      %v308 = vpop.f32.mrb[0].mxu0
      %v309 = vadd.f32 0.0, %v308
      %v310 = vpop.f32.mrb[0].mxu0
      %v311 = vadd.f32 0.0, %v310
      %312 = vdwg.mxu0
      %313 = vmatprep.subr.mxu0 0.0
      %314 = vmatpush1.msra.mxu0 %v225
      %315 = vmatprep.subr.mxu0 0.0
      %316 = vmatpush1.msra.mxu0 0.0
      %317 = vmatprep.subr.mxu0 0.0
      %318 = vmatpush1.msra.mxu0 0.0
      %319 = vmatprep.subr.mxu0 0.0
      %320 = vmatpush1.msra.mxu0 0.0
      %321 = vmatprep.subr.mxu0 0.0
      %322 = vmatpush1.msra.mxu0 0.0
      %323 = vmatprep.subr.mxu0 0.0
      %324 = vmatpush1.msra.mxu0 0.0
      %325 = vmatprep.subr.mxu0 0.0
      %326 = vmatpush1.msra.mxu0 0.0
      %327 = vmatprep.subr.mxu0 0.0
      %328 = vmatpush1.msra.mxu0 0.0
      %329 = vmatprep.subr.mxu0 0.0
      %330 = vmatpush1.msra.mxu0 0.0
      %331 = vmatprep.subr.mxu0 0.0
      %332 = vmatpush1.msra.mxu0 0.0
      %333 = vmatprep.subr.mxu0 0.0
      %334 = vmatpush1.msra.mxu0 0.0
      %335 = vmatprep.subr.mxu0 0.0
      %336 = vmatpush1.msra.mxu0 0.0
      %337 = vmatprep.subr.mxu0 0.0
      %338 = vmatpush1.msra.mxu0 0.0
      %339 = vmatprep.subr.mxu0 0.0
      %340 = vmatpush1.msra.mxu0 0.0
      %341 = vmatprep.subr.mxu0 0.0
      %342 = vmatpush1.msra.mxu0 0.0
      %343 = vmatprep.subr.mxu0 0.0
      %344 = vmatpush1.msra.mxu0 0.0
      %345 = vmatprep.subr.mxu0 0.0
      %346 = vmatpush1.msra.mxu0 0.0
      %347 = vmatprep.subr.mxu0 0.0
      %348 = vmatpush1.msra.mxu0 0.0
      %349 = vmatprep.subr.mxu0 0.0
      %350 = vmatpush1.msra.mxu0 0.0
      %351 = vmatprep.subr.mxu0 0.0
      %352 = vmatpush1.msra.mxu0 0.0
      %353 = vmatprep.subr.mxu0 0.0
      %354 = vmatpush1.msra.mxu0 0.0
      %355 = vmatprep.subr.mxu0 0.0
      %356 = vmatpush1.msra.mxu0 0.0
      %357 = vmatprep.subr.mxu0 0.0
      %358 = vmatpush1.msra.mxu0 0.0
      %359 = vmatprep.subr.mxu0 0.0
      %360 = vmatpush1.msra.mxu0 0.0
      %361 = vmatprep.subr.mxu0 0.0
      %362 = vmatpush1.msra.mxu0 0.0
      %363 = vmatprep.subr.mxu0 0.0
      %364 = vmatpush1.msra.mxu0 0.0
      %365 = vmatprep.subr.mxu0 0.0
      %366 = vmatpush1.msra.mxu0 0.0
      %367 = vmatprep.subr.mxu0 0.0
      %368 = vmatpush1.msra.mxu0 0.0
      %369 = vmatprep.subr.mxu0 0.0
      %370 = vmatpush1.msra.mxu0 0.0
      %371 = vmatprep.subr.mxu0 0.0
      %372 = vmatpush1.msra.mxu0 0.0
      %373 = vmatprep.subr.mxu0 0.0
      %374 = vmatpush1.msra.mxu0 0.0
      %375 = vmatprep.subr.mxu0 0.0
      %376 = vmatpush1.msra.mxu0 0.0
      %377 = vmatprep.mubr.f32.mxu0 0.0
      %378 = vmatmul.mubr.f32.gmra.mrb[0].mxu0 %v231
      %v379 = vpop.f32.mrb[0].mxu0
      %v380 = vadd.f32 0.0, %v379
      %v381 = vpop.f32.mrb[0].mxu0
      %382 = vmatprep.mubr.f32.mxu0 0.0
      %383 = vmatmul.mubr.f32.gmra.mrb[0].mxu0 %v234
      %v384 = vpop.f32.mrb[0].mxu0
      %v385 = vadd.f32 0.0, %v384
      %v386 = vpop.f32.mrb[0].mxu0
      %387 = vdwg.mxu0
      %v389 = vsel %vm229, %v198, 0
      %v392 = vsel %vm229, %v199, 0
      %394 = vmatprep.subr.mxu0 %v201
      %395 = vmatpush1.msra.mxu0 %v200
      %396 = vmatprep.subr.mxu0 0.0
      %397 = vmatpush1.msra.mxu0 0.0
      %398 = vmatprep.subr.mxu0 0.0
      %399 = vmatpush1.msra.mxu0 0.0
      %400 = vmatprep.subr.mxu0 0.0
      %401 = vmatpush1.msra.mxu0 0.0
      %402 = vmatprep.subr.mxu0 0.0
      %403 = vmatpush1.msra.mxu0 0.0
      %404 = vmatprep.subr.mxu0 0.0
      %405 = vmatpush1.msra.mxu0 0.0
      %406 = vmatprep.subr.mxu0 0.0
      %407 = vmatpush1.msra.mxu0 0.0
      %408 = vmatprep.subr.mxu0 0.0
      %409 = vmatpush1.msra.mxu0 0.0
      %410 = vmatprep.subr.mxu0 0.0
      %411 = vmatpush1.msra.mxu0 0.0
      %412 = vmatprep.subr.mxu0 0.0
      %413 = vmatpush1.msra.mxu0 0.0
      %414 = vmatprep.subr.mxu0 0.0
      %415 = vmatpush1.msra.mxu0 0.0
      %416 = vmatprep.subr.mxu0 0.0
      %417 = vmatpush1.msra.mxu0 0.0
      %418 = vmatprep.subr.mxu0 0.0
      %419 = vmatpush1.msra.mxu0 0.0
      %420 = vmatprep.subr.mxu0 0.0
      %421 = vmatpush1.msra.mxu0 0.0
      %422 = vmatprep.subr.mxu0 0.0
      %423 = vmatpush1.msra.mxu0 0.0
      %424 = vmatprep.subr.mxu0 0.0
      %425 = vmatpush1.msra.mxu0 0.0
      %426 = vmatprep.subr.mxu0 0.0
      %427 = vmatpush1.msra.mxu0 0.0
      %428 = vmatprep.subr.mxu0 0.0
      %429 = vmatpush1.msra.mxu0 0.0
      %430 = vmatprep.subr.mxu0 0.0
      %431 = vmatpush1.msra.mxu0 0.0
      %432 = vmatprep.subr.mxu0 0.0
      %433 = vmatpush1.msra.mxu0 0.0
      %434 = vmatprep.subr.mxu0 0.0
      %435 = vmatpush1.msra.mxu0 0.0
      %436 = vmatprep.subr.mxu0 0.0
      %437 = vmatpush1.msra.mxu0 0.0
      %438 = vmatprep.subr.mxu0 0.0
      %439 = vmatpush1.msra.mxu0 0.0
      %440 = vmatprep.subr.mxu0 0.0
      %441 = vmatpush1.msra.mxu0 0.0
      %442 = vmatprep.subr.mxu0 0.0
      %443 = vmatpush1.msra.mxu0 0.0
      %444 = vmatprep.subr.mxu0 0.0
      %445 = vmatpush1.msra.mxu0 0.0
      %446 = vmatprep.subr.mxu0 0.0
      %447 = vmatpush1.msra.mxu0 0.0
      %448 = vmatprep.subr.mxu0 0.0
      %449 = vmatpush1.msra.mxu0 0.0
      %450 = vmatprep.subr.mxu0 0.0
      %451 = vmatpush1.msra.mxu0 0.0
      %452 = vmatprep.subr.mxu0 0.0
      %453 = vmatpush1.msra.mxu0 0.0
      %454 = vmatprep.subr.mxu0 0.0
      %455 = vmatpush1.msra.mxu0 0.0
      %456 = vmatprep.subr.mxu0 0.0
      %457 = vmatpush1.msra.mxu0 0.0
      %458 = vmatprep.mubr.f32.mxu0 0.0
      %459 = vmatmul.mubr.f32.gmra.mrb[0].mxu0 %v389
      %v460 = vpop.f32.mrb[0].mxu0
      %v461 = vadd.f32 %v303, %v460
      %v462 = vpop.f32.mrb[0].mxu0
      %v463 = vadd.f32 %v305, %v462
      %464 = vmatprep.mubr.f32.mxu0 0.0
      %465 = vmatmul.mubr.f32.gmra.mrb[0].mxu0 %v392
      %v466 = vpop.f32.mrb[0].mxu0
      %v467 = vadd.f32 %v309, %v466
      %v468 = vpop.f32.mrb[0].mxu0
      %v469 = vadd.f32 %v311, %v468
      %470 = vdwg.mxu0
      %471 = vmatprep.subr.mxu0 0.0
      %472 = vmatpush1.msra.mxu0 %v202
      %473 = vmatprep.subr.mxu0 0.0
      %474 = vmatpush1.msra.mxu0 0.0
      %475 = vmatprep.subr.mxu0 0.0
      %476 = vmatpush1.msra.mxu0 0.0
      %477 = vmatprep.subr.mxu0 0.0
      %478 = vmatpush1.msra.mxu0 0.0
      %479 = vmatprep.subr.mxu0 0.0
      %480 = vmatpush1.msra.mxu0 0.0
      %481 = vmatprep.subr.mxu0 0.0
      %482 = vmatpush1.msra.mxu0 0.0
      %483 = vmatprep.subr.mxu0 0.0
      %484 = vmatpush1.msra.mxu0 0.0
      %485 = vmatprep.subr.mxu0 0.0
      %486 = vmatpush1.msra.mxu0 0.0
      %487 = vmatprep.subr.mxu0 0.0
      %488 = vmatpush1.msra.mxu0 0.0
      %489 = vmatprep.subr.mxu0 0.0
      %490 = vmatpush1.msra.mxu0 0.0
      %491 = vmatprep.subr.mxu0 0.0
      %492 = vmatpush1.msra.mxu0 0.0
      %493 = vmatprep.subr.mxu0 0.0
      %494 = vmatpush1.msra.mxu0 0.0
      %495 = vmatprep.subr.mxu0 0.0
      %496 = vmatpush1.msra.mxu0 0.0
      %497 = vmatprep.subr.mxu0 0.0
      %498 = vmatpush1.msra.mxu0 0.0
      %499 = vmatprep.subr.mxu0 0.0
      %500 = vmatpush1.msra.mxu0 0.0
      %501 = vmatprep.subr.mxu0 0.0
      %502 = vmatpush1.msra.mxu0 0.0
      %503 = vmatprep.subr.mxu0 0.0
      %504 = vmatpush1.msra.mxu0 0.0
      %505 = vmatprep.subr.mxu0 0.0
      %506 = vmatpush1.msra.mxu0 0.0
      %507 = vmatprep.subr.mxu0 0.0
      %508 = vmatpush1.msra.mxu0 0.0
      %509 = vmatprep.subr.mxu0 0.0
      %510 = vmatpush1.msra.mxu0 0.0
      %511 = vmatprep.subr.mxu0 0.0
      %512 = vmatpush1.msra.mxu0 0.0
      %513 = vmatprep.subr.mxu0 0.0
      %514 = vmatpush1.msra.mxu0 0.0
      %515 = vmatprep.subr.mxu0 0.0
      %516 = vmatpush1.msra.mxu0 0.0
      %517 = vmatprep.subr.mxu0 0.0
      %518 = vmatpush1.msra.mxu0 0.0
      %519 = vmatprep.subr.mxu0 0.0
      %520 = vmatpush1.msra.mxu0 0.0
      %521 = vmatprep.subr.mxu0 0.0
      %522 = vmatpush1.msra.mxu0 0.0
      %523 = vmatprep.subr.mxu0 0.0
      %524 = vmatpush1.msra.mxu0 0.0
      %525 = vmatprep.subr.mxu0 0.0
      %526 = vmatpush1.msra.mxu0 0.0
      %527 = vmatprep.subr.mxu0 0.0
      %528 = vmatpush1.msra.mxu0 0.0
      %529 = vmatprep.subr.mxu0 0.0
      %530 = vmatpush1.msra.mxu0 0.0
      %531 = vmatprep.subr.mxu0 0.0
      %532 = vmatpush1.msra.mxu0 0.0
      %533 = vmatprep.subr.mxu0 0.0
      %534 = vmatpush1.msra.mxu0 0.0
      %535 = vmatprep.mubr.f32.mxu0 0.0
      %536 = vmatmul.mubr.f32.gmra.mrb[0].mxu0 %v389
      %v537 = vpop.f32.mrb[0].mxu0
      %v538 = vadd.f32 %v380, %v537
      %v539 = vpop.f32.mrb[0].mxu0
      %540 = vmatprep.mubr.f32.mxu0 0.0
      %541 = vmatmul.mubr.f32.gmra.mrb[0].mxu0 %v392
      %v542 = vpop.f32.mrb[0].mxu0
      %v543 = vadd.f32 %v385, %v542
      %v544 = vpop.f32.mrb[0].mxu0
      %545 = vdwg.mxu0
      %s546 = scalar_lea.vmem %s1, 32
      %v547 = vld [vmem:[%s546] sm:$0xff]
      %v548 = vld [vmem:[%s546 + $0x8] sm:$0xff]
      %549 = vrot.lane.b32.xlu0 %v206, 126
      %v550 = vpop.permute.xlu0 %549
      %551 = vrot.lane.b32.xlu0 %v207, 126
      %v552 = vpop.permute.xlu0 %551
      %553 = vrot.lane.b32.xlu0 %v208, 126
      %v554 = vpop.permute.xlu0 %553
      %555 = vrot.lane.b32.xlu0 %v209, 126
      %v556 = vpop.permute.xlu0 %555
      %vm557 = vcmask 1031168
      %v558 = vsel %vm557, %v550, %v552
      %v559 = vsel %vm557, %v552, %v554
      %v560 = vsel %vm557, %v554, %v556
      %v565 = vsel %vm229, %v547, 0
      %v568 = vsel %vm229, %v548, 0
      %570 = vmatprep.subr.mxu0 %v559
      %571 = vmatpush1.msra.mxu0 %v558
      %572 = vmatprep.subr.mxu0 0.0
      %573 = vmatpush1.msra.mxu0 0.0
      %574 = vmatprep.subr.mxu0 0.0
      %575 = vmatpush1.msra.mxu0 0.0
      %576 = vmatprep.subr.mxu0 0.0
      %577 = vmatpush1.msra.mxu0 0.0
      %578 = vmatprep.subr.mxu0 0.0
      %579 = vmatpush1.msra.mxu0 0.0
      %580 = vmatprep.subr.mxu0 0.0
      %581 = vmatpush1.msra.mxu0 0.0
      %582 = vmatprep.subr.mxu0 0.0
      %583 = vmatpush1.msra.mxu0 0.0
      %584 = vmatprep.subr.mxu0 0.0
      %585 = vmatpush1.msra.mxu0 0.0
      %586 = vmatprep.subr.mxu0 0.0
      %587 = vmatpush1.msra.mxu0 0.0
      %588 = vmatprep.subr.mxu0 0.0
      %589 = vmatpush1.msra.mxu0 0.0
      %590 = vmatprep.subr.mxu0 0.0
      %591 = vmatpush1.msra.mxu0 0.0
      %592 = vmatprep.subr.mxu0 0.0
      %593 = vmatpush1.msra.mxu0 0.0
      %594 = vmatprep.subr.mxu0 0.0
      %595 = vmatpush1.msra.mxu0 0.0
      %596 = vmatprep.subr.mxu0 0.0
      %597 = vmatpush1.msra.mxu0 0.0
      %598 = vmatprep.subr.mxu0 0.0
      %599 = vmatpush1.msra.mxu0 0.0
      %600 = vmatprep.subr.mxu0 0.0
      %601 = vmatpush1.msra.mxu0 0.0
      %602 = vmatprep.subr.mxu0 0.0
      %603 = vmatpush1.msra.mxu0 0.0
      %604 = vmatprep.subr.mxu0 0.0
      %605 = vmatpush1.msra.mxu0 0.0
      %606 = vmatprep.subr.mxu0 0.0
      %607 = vmatpush1.msra.mxu0 0.0
      %608 = vmatprep.subr.mxu0 0.0
      %609 = vmatpush1.msra.mxu0 0.0
      %610 = vmatprep.subr.mxu0 0.0
      %611 = vmatpush1.msra.mxu0 0.0
      %612 = vmatprep.subr.mxu0 0.0
      %613 = vmatpush1.msra.mxu0 0.0
      %614 = vmatprep.subr.mxu0 0.0
      %615 = vmatpush1.msra.mxu0 0.0
      %616 = vmatprep.subr.mxu0 0.0
      %617 = vmatpush1.msra.mxu0 0.0
      %618 = vmatprep.subr.mxu0 0.0
      %619 = vmatpush1.msra.mxu0 0.0
      %620 = vmatprep.subr.mxu0 0.0
      %621 = vmatpush1.msra.mxu0 0.0
      %622 = vmatprep.subr.mxu0 0.0
      %623 = vmatpush1.msra.mxu0 0.0
      %624 = vmatprep.subr.mxu0 0.0
      %625 = vmatpush1.msra.mxu0 0.0
      %626 = vmatprep.subr.mxu0 0.0
      %627 = vmatpush1.msra.mxu0 0.0
      %628 = vmatprep.subr.mxu0 0.0
      %629 = vmatpush1.msra.mxu0 0.0
      %630 = vmatprep.subr.mxu0 0.0
      %631 = vmatpush1.msra.mxu0 0.0
      %632 = vmatprep.subr.mxu0 0.0
      %633 = vmatpush1.msra.mxu0 0.0
      %634 = vmatprep.mubr.f32.mxu0 0.0
      %635 = vmatmul.mubr.f32.gmra.mrb[0].mxu0 %v565
      %v636 = vpop.f32.mrb[0].mxu0
      %v637 = vadd.f32 0.0, %v636
      %v638 = vpop.f32.mrb[0].mxu0
      %v639 = vadd.f32 0.0, %v638
      %640 = vmatprep.mubr.f32.mxu0 0.0
      %641 = vmatmul.mubr.f32.gmra.mrb[0].mxu0 %v568
      %v642 = vpop.f32.mrb[0].mxu0
      %v643 = vadd.f32 0.0, %v642
      %v644 = vpop.f32.mrb[0].mxu0
      %v645 = vadd.f32 0.0, %v644
      %646 = vdwg.mxu0
      %647 = vmatprep.subr.mxu0 0.0
      %648 = vmatpush1.msra.mxu0 %v560
      %649 = vmatprep.subr.mxu0 0.0
      %650 = vmatpush1.msra.mxu0 0.0
      %651 = vmatprep.subr.mxu0 0.0
      %652 = vmatpush1.msra.mxu0 0.0
      %653 = vmatprep.subr.mxu0 0.0
      %654 = vmatpush1.msra.mxu0 0.0
      %655 = vmatprep.subr.mxu0 0.0
      %656 = vmatpush1.msra.mxu0 0.0
      %657 = vmatprep.subr.mxu0 0.0
      %658 = vmatpush1.msra.mxu0 0.0
      %659 = vmatprep.subr.mxu0 0.0
      %660 = vmatpush1.msra.mxu0 0.0
      %661 = vmatprep.subr.mxu0 0.0
      %662 = vmatpush1.msra.mxu0 0.0
      %663 = vmatprep.subr.mxu0 0.0
      %664 = vmatpush1.msra.mxu0 0.0
      %665 = vmatprep.subr.mxu0 0.0
      %666 = vmatpush1.msra.mxu0 0.0
      %667 = vmatprep.subr.mxu0 0.0
      %668 = vmatpush1.msra.mxu0 0.0
      %669 = vmatprep.subr.mxu0 0.0
      %670 = vmatpush1.msra.mxu0 0.0
      %671 = vmatprep.subr.mxu0 0.0
      %672 = vmatpush1.msra.mxu0 0.0
      %673 = vmatprep.subr.mxu0 0.0
      %674 = vmatpush1.msra.mxu0 0.0
      %675 = vmatprep.subr.mxu0 0.0
      %676 = vmatpush1.msra.mxu0 0.0
      %677 = vmatprep.subr.mxu0 0.0
      %678 = vmatpush1.msra.mxu0 0.0
      %679 = vmatprep.subr.mxu0 0.0
      %680 = vmatpush1.msra.mxu0 0.0
      %681 = vmatprep.subr.mxu0 0.0
      %682 = vmatpush1.msra.mxu0 0.0
      %683 = vmatprep.subr.mxu0 0.0
      %684 = vmatpush1.msra.mxu0 0.0
      %685 = vmatprep.subr.mxu0 0.0
      %686 = vmatpush1.msra.mxu0 0.0
      %687 = vmatprep.subr.mxu0 0.0
      %688 = vmatpush1.msra.mxu0 0.0
      %689 = vmatprep.subr.mxu0 0.0
      %690 = vmatpush1.msra.mxu0 0.0
      %691 = vmatprep.subr.mxu0 0.0
      %692 = vmatpush1.msra.mxu0 0.0
      %693 = vmatprep.subr.mxu0 0.0
      %694 = vmatpush1.msra.mxu0 0.0
      %695 = vmatprep.subr.mxu0 0.0
      %696 = vmatpush1.msra.mxu0 0.0
      %697 = vmatprep.subr.mxu0 0.0
      %698 = vmatpush1.msra.mxu0 0.0
      %699 = vmatprep.subr.mxu0 0.0
      %700 = vmatpush1.msra.mxu0 0.0
      %701 = vmatprep.subr.mxu0 0.0
      %702 = vmatpush1.msra.mxu0 0.0
      %703 = vmatprep.subr.mxu0 0.0
      %704 = vmatpush1.msra.mxu0 0.0
      %705 = vmatprep.subr.mxu0 0.0
      %706 = vmatpush1.msra.mxu0 0.0
      %707 = vmatprep.subr.mxu0 0.0
      %708 = vmatpush1.msra.mxu0 0.0
      %709 = vmatprep.subr.mxu0 0.0
      %710 = vmatpush1.msra.mxu0 0.0
      %711 = vmatprep.mubr.f32.mxu0 0.0
      %712 = vmatmul.mubr.f32.gmra.mrb[0].mxu0 %v565
      %v713 = vpop.f32.mrb[0].mxu0
      %v714 = vadd.f32 0.0, %v713
      %v715 = vpop.f32.mrb[0].mxu0
      %716 = vmatprep.mubr.f32.mxu0 0.0
      %717 = vmatmul.mubr.f32.gmra.mrb[0].mxu0 %v568
      %v718 = vpop.f32.mrb[0].mxu0
      %v719 = vadd.f32 0.0, %v718
      %v720 = vpop.f32.mrb[0].mxu0
      %721 = vdwg.mxu0
      %v722 = vadd.f32 %v461, %v637
      %v723 = vadd.f32 %v463, %v639
      %v724 = vadd.f32 %v538, %v714
      %v725 = vadd.f32 %v467, %v643
      %v726 = vadd.f32 %v469, %v645
      %v727 = vadd.f32 %v543, %v719
      %s728 = scalar_lea.vmem %s1, 48
      %v729 = vld [vmem:[%s728] sm:$0xff]
      %v730 = vld [vmem:[%s728 + $0x8] sm:$0xff]
      %731 = vrot.lane.b32.xlu0 %v206, 110
      %v732 = vpop.permute.xlu0 %731
      %733 = vrot.lane.b32.xlu0 %v207, 110
      %v734 = vpop.permute.xlu0 %733
      %735 = vrot.lane.b32.xlu0 %v208, 110
      %v736 = vpop.permute.xlu0 %735
      %737 = vrot.lane.b32.xlu0 %v209, 110
      %v738 = vpop.permute.xlu0 %737
      %vm739 = vcmask 900096
      %v740 = vsel %vm739, %v732, %v734
      %v741 = vsel %vm739, %v734, %v736
      %v742 = vsel %vm739, %v736, %v738
      %v747 = vsel %vm229, %v729, 0
      %v750 = vsel %vm229, %v730, 0
      %752 = vmatprep.subr.mxu0 %v741
      %753 = vmatpush1.msra.mxu0 %v740
      %754 = vmatprep.subr.mxu0 0.0
      %755 = vmatpush1.msra.mxu0 0.0
      %756 = vmatprep.subr.mxu0 0.0
      %757 = vmatpush1.msra.mxu0 0.0
      %758 = vmatprep.subr.mxu0 0.0
      %759 = vmatpush1.msra.mxu0 0.0
      %760 = vmatprep.subr.mxu0 0.0
      %761 = vmatpush1.msra.mxu0 0.0
      %762 = vmatprep.subr.mxu0 0.0
      %763 = vmatpush1.msra.mxu0 0.0
      %764 = vmatprep.subr.mxu0 0.0
      %765 = vmatpush1.msra.mxu0 0.0
      %766 = vmatprep.subr.mxu0 0.0
      %767 = vmatpush1.msra.mxu0 0.0
      %768 = vmatprep.subr.mxu0 0.0
      %769 = vmatpush1.msra.mxu0 0.0
      %770 = vmatprep.subr.mxu0 0.0
      %771 = vmatpush1.msra.mxu0 0.0
      %772 = vmatprep.subr.mxu0 0.0
      %773 = vmatpush1.msra.mxu0 0.0
      %774 = vmatprep.subr.mxu0 0.0
      %775 = vmatpush1.msra.mxu0 0.0
      %776 = vmatprep.subr.mxu0 0.0
      %777 = vmatpush1.msra.mxu0 0.0
      %778 = vmatprep.subr.mxu0 0.0
      %779 = vmatpush1.msra.mxu0 0.0
      %780 = vmatprep.subr.mxu0 0.0
      %781 = vmatpush1.msra.mxu0 0.0
      %782 = vmatprep.subr.mxu0 0.0
      %783 = vmatpush1.msra.mxu0 0.0
      %784 = vmatprep.subr.mxu0 0.0
      %785 = vmatpush1.msra.mxu0 0.0
      %786 = vmatprep.subr.mxu0 0.0
      %787 = vmatpush1.msra.mxu0 0.0
      %788 = vmatprep.subr.mxu0 0.0
      %789 = vmatpush1.msra.mxu0 0.0
      %790 = vmatprep.subr.mxu0 0.0
      %791 = vmatpush1.msra.mxu0 0.0
      %792 = vmatprep.subr.mxu0 0.0
      %793 = vmatpush1.msra.mxu0 0.0
      %794 = vmatprep.subr.mxu0 0.0
      %795 = vmatpush1.msra.mxu0 0.0
      %796 = vmatprep.subr.mxu0 0.0
      %797 = vmatpush1.msra.mxu0 0.0
      %798 = vmatprep.subr.mxu0 0.0
      %799 = vmatpush1.msra.mxu0 0.0
      %800 = vmatprep.subr.mxu0 0.0
      %801 = vmatpush1.msra.mxu0 0.0
      %802 = vmatprep.subr.mxu0 0.0
      %803 = vmatpush1.msra.mxu0 0.0
      %804 = vmatprep.subr.mxu0 0.0
      %805 = vmatpush1.msra.mxu0 0.0
      %806 = vmatprep.subr.mxu0 0.0
      %807 = vmatpush1.msra.mxu0 0.0
      %808 = vmatprep.subr.mxu0 0.0
      %809 = vmatpush1.msra.mxu0 0.0
      %810 = vmatprep.subr.mxu0 0.0
      %811 = vmatpush1.msra.mxu0 0.0
      %812 = vmatprep.subr.mxu0 0.0
      %813 = vmatpush1.msra.mxu0 0.0
      %814 = vmatprep.subr.mxu0 0.0
      %815 = vmatpush1.msra.mxu0 0.0
      %816 = vmatprep.mubr.f32.mxu0 0.0
      %817 = vmatmul.mubr.f32.gmra.mrb[0].mxu0 %v747
      %v818 = vpop.f32.mrb[0].mxu0
      %v819 = vadd.f32 0.0, %v818
      %v820 = vpop.f32.mrb[0].mxu0
      %v821 = vadd.f32 0.0, %v820
      %822 = vmatprep.mubr.f32.mxu0 0.0
      %823 = vmatmul.mubr.f32.gmra.mrb[0].mxu0 %v750
      %v824 = vpop.f32.mrb[0].mxu0
      %v825 = vadd.f32 0.0, %v824
      %v826 = vpop.f32.mrb[0].mxu0
      %v827 = vadd.f32 0.0, %v826
      %828 = vdwg.mxu0
      %829 = vmatprep.subr.mxu0 0.0
      %830 = vmatpush1.msra.mxu0 %v742
      %831 = vmatprep.subr.mxu0 0.0
      %832 = vmatpush1.msra.mxu0 0.0
      %833 = vmatprep.subr.mxu0 0.0
      %834 = vmatpush1.msra.mxu0 0.0
      %835 = vmatprep.subr.mxu0 0.0
      %836 = vmatpush1.msra.mxu0 0.0
      %837 = vmatprep.subr.mxu0 0.0
      %838 = vmatpush1.msra.mxu0 0.0
      %839 = vmatprep.subr.mxu0 0.0
      %840 = vmatpush1.msra.mxu0 0.0
      %841 = vmatprep.subr.mxu0 0.0
      %842 = vmatpush1.msra.mxu0 0.0
      %843 = vmatprep.subr.mxu0 0.0
      %844 = vmatpush1.msra.mxu0 0.0
      %845 = vmatprep.subr.mxu0 0.0
      %846 = vmatpush1.msra.mxu0 0.0
      %847 = vmatprep.subr.mxu0 0.0
      %848 = vmatpush1.msra.mxu0 0.0
      %849 = vmatprep.subr.mxu0 0.0
      %850 = vmatpush1.msra.mxu0 0.0
      %851 = vmatprep.subr.mxu0 0.0
      %852 = vmatpush1.msra.mxu0 0.0
      %853 = vmatprep.subr.mxu0 0.0
      %854 = vmatpush1.msra.mxu0 0.0
      %855 = vmatprep.subr.mxu0 0.0
      %856 = vmatpush1.msra.mxu0 0.0
      %857 = vmatprep.subr.mxu0 0.0
      %858 = vmatpush1.msra.mxu0 0.0
      %859 = vmatprep.subr.mxu0 0.0
      %860 = vmatpush1.msra.mxu0 0.0
      %861 = vmatprep.subr.mxu0 0.0
      %862 = vmatpush1.msra.mxu0 0.0
      %863 = vmatprep.subr.mxu0 0.0
      %864 = vmatpush1.msra.mxu0 0.0
      %865 = vmatprep.subr.mxu0 0.0
      %866 = vmatpush1.msra.mxu0 0.0
      %867 = vmatprep.subr.mxu0 0.0
      %868 = vmatpush1.msra.mxu0 0.0
      %869 = vmatprep.subr.mxu0 0.0
      %870 = vmatpush1.msra.mxu0 0.0
      %871 = vmatprep.subr.mxu0 0.0
      %872 = vmatpush1.msra.mxu0 0.0
      %873 = vmatprep.subr.mxu0 0.0
      %874 = vmatpush1.msra.mxu0 0.0
      %875 = vmatprep.subr.mxu0 0.0
      %876 = vmatpush1.msra.mxu0 0.0
      %877 = vmatprep.subr.mxu0 0.0
      %878 = vmatpush1.msra.mxu0 0.0
      %879 = vmatprep.subr.mxu0 0.0
      %880 = vmatpush1.msra.mxu0 0.0
      %881 = vmatprep.subr.mxu0 0.0
      %882 = vmatpush1.msra.mxu0 0.0
      %883 = vmatprep.subr.mxu0 0.0
      %884 = vmatpush1.msra.mxu0 0.0
      %885 = vmatprep.subr.mxu0 0.0
      %886 = vmatpush1.msra.mxu0 0.0
      %887 = vmatprep.subr.mxu0 0.0
      %888 = vmatpush1.msra.mxu0 0.0
      %889 = vmatprep.subr.mxu0 0.0
      %890 = vmatpush1.msra.mxu0 0.0
      %891 = vmatprep.subr.mxu0 0.0
      %892 = vmatpush1.msra.mxu0 0.0
      %893 = vmatprep.mubr.f32.mxu0 0.0
      %894 = vmatmul.mubr.f32.gmra.mrb[0].mxu0 %v747
      %v895 = vpop.f32.mrb[0].mxu0
      %v896 = vadd.f32 0.0, %v895
      %v897 = vpop.f32.mrb[0].mxu0
      %898 = vmatprep.mubr.f32.mxu0 0.0
      %899 = vmatmul.mubr.f32.gmra.mrb[0].mxu0 %v750
      %v900 = vpop.f32.mrb[0].mxu0
      %v901 = vadd.f32 0.0, %v900
      %v902 = vpop.f32.mrb[0].mxu0
      %903 = vdwg.mxu0
      %v904 = vadd.f32 %v722, %v819
      %v905 = vadd.f32 %v723, %v821
      %v906 = vadd.f32 %v724, %v896
      %v907 = vadd.f32 %v725, %v825
      %v908 = vadd.f32 %v726, %v827
      %v909 = vadd.f32 %v727, %v901
      %s910 = scalar_lea.vmem %s1, 64
      %v911 = vld [vmem:[%s910] sm:$0xff]
      %v912 = vld [vmem:[%s910 + $0x8] sm:$0xff]
      %913 = vrot.lane.b32.xlu0 %v206, 109
      %v914 = vpop.permute.xlu0 %913
      %915 = vrot.lane.b32.xlu0 %v207, 109
      %v916 = vpop.permute.xlu0 %915
      %917 = vrot.lane.b32.xlu0 %v208, 109
      %v918 = vpop.permute.xlu0 %917
      %919 = vrot.lane.b32.xlu0 %v209, 109
      %v920 = vpop.permute.xlu0 %919
      %vm921 = vcmask 891904
      %v922 = vsel %vm921, %v914, %v916
      %v923 = vsel %vm921, %v916, %v918
      %v924 = vsel %vm921, %v918, %v920
      %v929 = vsel %vm229, %v911, 0
      %v932 = vsel %vm229, %v912, 0
      %934 = vmatprep.subr.mxu0 %v923
      %935 = vmatpush1.msra.mxu0 %v922
      %936 = vmatprep.subr.mxu0 0.0
      %937 = vmatpush1.msra.mxu0 0.0
      %938 = vmatprep.subr.mxu0 0.0
      %939 = vmatpush1.msra.mxu0 0.0
      %940 = vmatprep.subr.mxu0 0.0
      %941 = vmatpush1.msra.mxu0 0.0
      %942 = vmatprep.subr.mxu0 0.0
      %943 = vmatpush1.msra.mxu0 0.0
      %944 = vmatprep.subr.mxu0 0.0
      %945 = vmatpush1.msra.mxu0 0.0
      %946 = vmatprep.subr.mxu0 0.0
      %947 = vmatpush1.msra.mxu0 0.0
      %948 = vmatprep.subr.mxu0 0.0
      %949 = vmatpush1.msra.mxu0 0.0
      %950 = vmatprep.subr.mxu0 0.0
      %951 = vmatpush1.msra.mxu0 0.0
      %952 = vmatprep.subr.mxu0 0.0
      %953 = vmatpush1.msra.mxu0 0.0
      %954 = vmatprep.subr.mxu0 0.0
      %955 = vmatpush1.msra.mxu0 0.0
      %956 = vmatprep.subr.mxu0 0.0
      %957 = vmatpush1.msra.mxu0 0.0
      %958 = vmatprep.subr.mxu0 0.0
      %959 = vmatpush1.msra.mxu0 0.0
      %960 = vmatprep.subr.mxu0 0.0
      %961 = vmatpush1.msra.mxu0 0.0
      %962 = vmatprep.subr.mxu0 0.0
      %963 = vmatpush1.msra.mxu0 0.0
      %964 = vmatprep.subr.mxu0 0.0
      %965 = vmatpush1.msra.mxu0 0.0
      %966 = vmatprep.subr.mxu0 0.0
      %967 = vmatpush1.msra.mxu0 0.0
      %968 = vmatprep.subr.mxu0 0.0
      %969 = vmatpush1.msra.mxu0 0.0
      %970 = vmatprep.subr.mxu0 0.0
      %971 = vmatpush1.msra.mxu0 0.0
      %972 = vmatprep.subr.mxu0 0.0
      %973 = vmatpush1.msra.mxu0 0.0
      %974 = vmatprep.subr.mxu0 0.0
      %975 = vmatpush1.msra.mxu0 0.0
      %976 = vmatprep.subr.mxu0 0.0
      %977 = vmatpush1.msra.mxu0 0.0
      %978 = vmatprep.subr.mxu0 0.0
      %979 = vmatpush1.msra.mxu0 0.0
      %980 = vmatprep.subr.mxu0 0.0
      %981 = vmatpush1.msra.mxu0 0.0
      %982 = vmatprep.subr.mxu0 0.0
      %983 = vmatpush1.msra.mxu0 0.0
      %984 = vmatprep.subr.mxu0 0.0
      %985 = vmatpush1.msra.mxu0 0.0
      %986 = vmatprep.subr.mxu0 0.0
      %987 = vmatpush1.msra.mxu0 0.0
      %988 = vmatprep.subr.mxu0 0.0
      %989 = vmatpush1.msra.mxu0 0.0
      %990 = vmatprep.subr.mxu0 0.0
      %991 = vmatpush1.msra.mxu0 0.0
      %992 = vmatprep.subr.mxu0 0.0
      %993 = vmatpush1.msra.mxu0 0.0
      %994 = vmatprep.subr.mxu0 0.0
      %995 = vmatpush1.msra.mxu0 0.0
      %996 = vmatprep.subr.mxu0 0.0
      %997 = vmatpush1.msra.mxu0 0.0
      %998 = vmatprep.mubr.f32.mxu0 0.0
      %999 = vmatmul.mubr.f32.gmra.mrb[0].mxu0 %v929
      %v1000 = vpop.f32.mrb[0].mxu0
      %v1001 = vadd.f32 0.0, %v1000
      %v1002 = vpop.f32.mrb[0].mxu0
      %v1003 = vadd.f32 0.0, %v1002
      %1004 = vmatprep.mubr.f32.mxu0 0.0
      %1005 = vmatmul.mubr.f32.gmra.mrb[0].mxu0 %v932
      %v1006 = vpop.f32.mrb[0].mxu0
      %v1007 = vadd.f32 0.0, %v1006
      %v1008 = vpop.f32.mrb[0].mxu0
      %v1009 = vadd.f32 0.0, %v1008
      %1010 = vdwg.mxu0
      %1011 = vmatprep.subr.mxu0 0.0
      %1012 = vmatpush1.msra.mxu0 %v924
      %1013 = vmatprep.subr.mxu0 0.0
      %1014 = vmatpush1.msra.mxu0 0.0
      %1015 = vmatprep.subr.mxu0 0.0
      %1016 = vmatpush1.msra.mxu0 0.0
      %1017 = vmatprep.subr.mxu0 0.0
      %1018 = vmatpush1.msra.mxu0 0.0
      %1019 = vmatprep.subr.mxu0 0.0
      %1020 = vmatpush1.msra.mxu0 0.0
      %1021 = vmatprep.subr.mxu0 0.0
      %1022 = vmatpush1.msra.mxu0 0.0
      %1023 = vmatprep.subr.mxu0 0.0
      %1024 = vmatpush1.msra.mxu0 0.0
      %1025 = vmatprep.subr.mxu0 0.0
      %1026 = vmatpush1.msra.mxu0 0.0
      %1027 = vmatprep.subr.mxu0 0.0
      %1028 = vmatpush1.msra.mxu0 0.0
      %1029 = vmatprep.subr.mxu0 0.0
      %1030 = vmatpush1.msra.mxu0 0.0
      %1031 = vmatprep.subr.mxu0 0.0
      %1032 = vmatpush1.msra.mxu0 0.0
      %1033 = vmatprep.subr.mxu0 0.0
      %1034 = vmatpush1.msra.mxu0 0.0
      %1035 = vmatprep.subr.mxu0 0.0
      %1036 = vmatpush1.msra.mxu0 0.0
      %1037 = vmatprep.subr.mxu0 0.0
      %1038 = vmatpush1.msra.mxu0 0.0
      %1039 = vmatprep.subr.mxu0 0.0
      %1040 = vmatpush1.msra.mxu0 0.0
      %1041 = vmatprep.subr.mxu0 0.0
      %1042 = vmatpush1.msra.mxu0 0.0
      %1043 = vmatprep.subr.mxu0 0.0
      %1044 = vmatpush1.msra.mxu0 0.0
      %1045 = vmatprep.subr.mxu0 0.0
      %1046 = vmatpush1.msra.mxu0 0.0
      %1047 = vmatprep.subr.mxu0 0.0
      %1048 = vmatpush1.msra.mxu0 0.0
      %1049 = vmatprep.subr.mxu0 0.0
      %1050 = vmatpush1.msra.mxu0 0.0
      %1051 = vmatprep.subr.mxu0 0.0
      %1052 = vmatpush1.msra.mxu0 0.0
      %1053 = vmatprep.subr.mxu0 0.0
      %1054 = vmatpush1.msra.mxu0 0.0
      %1055 = vmatprep.subr.mxu0 0.0
      %1056 = vmatpush1.msra.mxu0 0.0
      %1057 = vmatprep.subr.mxu0 0.0
      %1058 = vmatpush1.msra.mxu0 0.0
      %1059 = vmatprep.subr.mxu0 0.0
      %1060 = vmatpush1.msra.mxu0 0.0
      %1061 = vmatprep.subr.mxu0 0.0
      %1062 = vmatpush1.msra.mxu0 0.0
      %1063 = vmatprep.subr.mxu0 0.0
      %1064 = vmatpush1.msra.mxu0 0.0
      %1065 = vmatprep.subr.mxu0 0.0
      %1066 = vmatpush1.msra.mxu0 0.0
      %1067 = vmatprep.subr.mxu0 0.0
      %1068 = vmatpush1.msra.mxu0 0.0
      %1069 = vmatprep.subr.mxu0 0.0
      %1070 = vmatpush1.msra.mxu0 0.0
      %1071 = vmatprep.subr.mxu0 0.0
      %1072 = vmatpush1.msra.mxu0 0.0
      %1073 = vmatprep.subr.mxu0 0.0
      %1074 = vmatpush1.msra.mxu0 0.0
      %1075 = vmatprep.mubr.f32.mxu0 0.0
      %1076 = vmatmul.mubr.f32.gmra.mrb[0].mxu0 %v929
      %v1077 = vpop.f32.mrb[0].mxu0
      %v1078 = vadd.f32 0.0, %v1077
      %v1079 = vpop.f32.mrb[0].mxu0
      %1080 = vmatprep.mubr.f32.mxu0 0.0
      %1081 = vmatmul.mubr.f32.gmra.mrb[0].mxu0 %v932
      %v1082 = vpop.f32.mrb[0].mxu0
      %v1083 = vadd.f32 0.0, %v1082
      %v1084 = vpop.f32.mrb[0].mxu0
      %1085 = vdwg.mxu0
      %v1086 = vadd.f32 %v904, %v1001
      %v1087 = vadd.f32 %v905, %v1003
      %v1088 = vadd.f32 %v906, %v1078
      %v1089 = vadd.f32 %v907, %v1007
      %v1090 = vadd.f32 %v908, %v1009
      %v1091 = vadd.f32 %v909, %v1083
      %s1092 = scalar_lea.vmem %s1, 80
      %v1093 = vld [vmem:[%s1092] sm:$0xff]
      %v1094 = vld [vmem:[%s1092 + $0x8] sm:$0xff]
      %1095 = vrot.lane.b32.xlu0 %v206, 108
      %v1096 = vpop.permute.xlu0 %1095
      %1097 = vrot.lane.b32.xlu0 %v207, 108
      %v1098 = vpop.permute.xlu0 %1097
      %1099 = vrot.lane.b32.xlu0 %v208, 108
      %v1100 = vpop.permute.xlu0 %1099
      %1101 = vrot.lane.b32.xlu0 %v209, 108
      %v1102 = vpop.permute.xlu0 %1101
      %vm1103 = vcmask 883712
      %v1104 = vsel %vm1103, %v1096, %v1098
      %v1105 = vsel %vm1103, %v1098, %v1100
      %v1106 = vsel %vm1103, %v1100, %v1102
      %v1111 = vsel %vm229, %v1093, 0
      %v1114 = vsel %vm229, %v1094, 0
      %1116 = vmatprep.subr.mxu0 %v1105
      %1117 = vmatpush1.msra.mxu0 %v1104
      %1118 = vmatprep.subr.mxu0 0.0
      %1119 = vmatpush1.msra.mxu0 0.0
      %1120 = vmatprep.subr.mxu0 0.0
      %1121 = vmatpush1.msra.mxu0 0.0
      %1122 = vmatprep.subr.mxu0 0.0
      %1123 = vmatpush1.msra.mxu0 0.0
      %1124 = vmatprep.subr.mxu0 0.0
      %1125 = vmatpush1.msra.mxu0 0.0
      %1126 = vmatprep.subr.mxu0 0.0
      %1127 = vmatpush1.msra.mxu0 0.0
      %1128 = vmatprep.subr.mxu0 0.0
      %1129 = vmatpush1.msra.mxu0 0.0
      %1130 = vmatprep.subr.mxu0 0.0
      %1131 = vmatpush1.msra.mxu0 0.0
      %1132 = vmatprep.subr.mxu0 0.0
      %1133 = vmatpush1.msra.mxu0 0.0
      %1134 = vmatprep.subr.mxu0 0.0
      %1135 = vmatpush1.msra.mxu0 0.0
      %1136 = vmatprep.subr.mxu0 0.0
      %1137 = vmatpush1.msra.mxu0 0.0
      %1138 = vmatprep.subr.mxu0 0.0
      %1139 = vmatpush1.msra.mxu0 0.0
      %1140 = vmatprep.subr.mxu0 0.0
      %1141 = vmatpush1.msra.mxu0 0.0
      %1142 = vmatprep.subr.mxu0 0.0
      %1143 = vmatpush1.msra.mxu0 0.0
      %1144 = vmatprep.subr.mxu0 0.0
      %1145 = vmatpush1.msra.mxu0 0.0
      %1146 = vmatprep.subr.mxu0 0.0
      %1147 = vmatpush1.msra.mxu0 0.0
      %1148 = vmatprep.subr.mxu0 0.0
      %1149 = vmatpush1.msra.mxu0 0.0
      %1150 = vmatprep.subr.mxu0 0.0
      %1151 = vmatpush1.msra.mxu0 0.0
      %1152 = vmatprep.subr.mxu0 0.0
      %1153 = vmatpush1.msra.mxu0 0.0
      %1154 = vmatprep.subr.mxu0 0.0
      %1155 = vmatpush1.msra.mxu0 0.0
      %1156 = vmatprep.subr.mxu0 0.0
      %1157 = vmatpush1.msra.mxu0 0.0
      %1158 = vmatprep.subr.mxu0 0.0
      %1159 = vmatpush1.msra.mxu0 0.0
      %1160 = vmatprep.subr.mxu0 0.0
      %1161 = vmatpush1.msra.mxu0 0.0
      %1162 = vmatprep.subr.mxu0 0.0
      %1163 = vmatpush1.msra.mxu0 0.0
      %1164 = vmatprep.subr.mxu0 0.0
      %1165 = vmatpush1.msra.mxu0 0.0
      %1166 = vmatprep.subr.mxu0 0.0
      %1167 = vmatpush1.msra.mxu0 0.0
      %1168 = vmatprep.subr.mxu0 0.0
      %1169 = vmatpush1.msra.mxu0 0.0
      %1170 = vmatprep.subr.mxu0 0.0
      %1171 = vmatpush1.msra.mxu0 0.0
      %1172 = vmatprep.subr.mxu0 0.0
      %1173 = vmatpush1.msra.mxu0 0.0
      %1174 = vmatprep.subr.mxu0 0.0
      %1175 = vmatpush1.msra.mxu0 0.0
      %1176 = vmatprep.subr.mxu0 0.0
      %1177 = vmatpush1.msra.mxu0 0.0
      %1178 = vmatprep.subr.mxu0 0.0
      %1179 = vmatpush1.msra.mxu0 0.0
      %1180 = vmatprep.mubr.f32.mxu0 0.0
      %1181 = vmatmul.mubr.f32.gmra.mrb[0].mxu0 %v1111
      %v1182 = vpop.f32.mrb[0].mxu0
      %v1183 = vadd.f32 0.0, %v1182
      %v1184 = vpop.f32.mrb[0].mxu0
      %v1185 = vadd.f32 0.0, %v1184
      %1186 = vmatprep.mubr.f32.mxu0 0.0
      %1187 = vmatmul.mubr.f32.gmra.mrb[0].mxu0 %v1114
      %v1188 = vpop.f32.mrb[0].mxu0
      %v1189 = vadd.f32 0.0, %v1188
      %v1190 = vpop.f32.mrb[0].mxu0
      %v1191 = vadd.f32 0.0, %v1190
      %1192 = vdwg.mxu0
      %1193 = vmatprep.subr.mxu0 0.0
      %1194 = vmatpush1.msra.mxu0 %v1106
      %1195 = vmatprep.subr.mxu0 0.0
      %1196 = vmatpush1.msra.mxu0 0.0
      %1197 = vmatprep.subr.mxu0 0.0
      %1198 = vmatpush1.msra.mxu0 0.0
      %1199 = vmatprep.subr.mxu0 0.0
      %1200 = vmatpush1.msra.mxu0 0.0
      %1201 = vmatprep.subr.mxu0 0.0
      %1202 = vmatpush1.msra.mxu0 0.0
      %1203 = vmatprep.subr.mxu0 0.0
      %1204 = vmatpush1.msra.mxu0 0.0
      %1205 = vmatprep.subr.mxu0 0.0
      %1206 = vmatpush1.msra.mxu0 0.0
      %1207 = vmatprep.subr.mxu0 0.0
      %1208 = vmatpush1.msra.mxu0 0.0
      %1209 = vmatprep.subr.mxu0 0.0
      %1210 = vmatpush1.msra.mxu0 0.0
      %1211 = vmatprep.subr.mxu0 0.0
      %1212 = vmatpush1.msra.mxu0 0.0
      %1213 = vmatprep.subr.mxu0 0.0
      %1214 = vmatpush1.msra.mxu0 0.0
      %1215 = vmatprep.subr.mxu0 0.0
      %1216 = vmatpush1.msra.mxu0 0.0
      %1217 = vmatprep.subr.mxu0 0.0
      %1218 = vmatpush1.msra.mxu0 0.0
      %1219 = vmatprep.subr.mxu0 0.0
      %1220 = vmatpush1.msra.mxu0 0.0
      %1221 = vmatprep.subr.mxu0 0.0
      %1222 = vmatpush1.msra.mxu0 0.0
      %1223 = vmatprep.subr.mxu0 0.0
      %1224 = vmatpush1.msra.mxu0 0.0
      %1225 = vmatprep.subr.mxu0 0.0
      %1226 = vmatpush1.msra.mxu0 0.0
      %1227 = vmatprep.subr.mxu0 0.0
      %1228 = vmatpush1.msra.mxu0 0.0
      %1229 = vmatprep.subr.mxu0 0.0
      %1230 = vmatpush1.msra.mxu0 0.0
      %1231 = vmatprep.subr.mxu0 0.0
      %1232 = vmatpush1.msra.mxu0 0.0
      %1233 = vmatprep.subr.mxu0 0.0
      %1234 = vmatpush1.msra.mxu0 0.0
      %1235 = vmatprep.subr.mxu0 0.0
      %1236 = vmatpush1.msra.mxu0 0.0
      %1237 = vmatprep.subr.mxu0 0.0
      %1238 = vmatpush1.msra.mxu0 0.0
      %1239 = vmatprep.subr.mxu0 0.0
      %1240 = vmatpush1.msra.mxu0 0.0
      %1241 = vmatprep.subr.mxu0 0.0
      %1242 = vmatpush1.msra.mxu0 0.0
      %1243 = vmatprep.subr.mxu0 0.0
      %1244 = vmatpush1.msra.mxu0 0.0
      %1245 = vmatprep.subr.mxu0 0.0
      %1246 = vmatpush1.msra.mxu0 0.0
      %1247 = vmatprep.subr.mxu0 0.0
      %1248 = vmatpush1.msra.mxu0 0.0
      %1249 = vmatprep.subr.mxu0 0.0
      %1250 = vmatpush1.msra.mxu0 0.0
      %1251 = vmatprep.subr.mxu0 0.0
      %1252 = vmatpush1.msra.mxu0 0.0
      %1253 = vmatprep.subr.mxu0 0.0
      %1254 = vmatpush1.msra.mxu0 0.0
      %1255 = vmatprep.subr.mxu0 0.0
      %1256 = vmatpush1.msra.mxu0 0.0
      %1257 = vmatprep.mubr.f32.mxu0 0.0
      %1258 = vmatmul.mubr.f32.gmra.mrb[0].mxu0 %v1111
      %v1259 = vpop.f32.mrb[0].mxu0
      %v1260 = vadd.f32 0.0, %v1259
      %v1261 = vpop.f32.mrb[0].mxu0
      %1262 = vmatprep.mubr.f32.mxu0 0.0
      %1263 = vmatmul.mubr.f32.gmra.mrb[0].mxu0 %v1114
      %v1264 = vpop.f32.mrb[0].mxu0
      %v1265 = vadd.f32 0.0, %v1264
      %v1266 = vpop.f32.mrb[0].mxu0
      %1267 = vdwg.mxu0
      %v1268 = vadd.f32 %v1086, %v1183
      %v1269 = vadd.f32 %v1087, %v1185
      %v1270 = vadd.f32 %v1088, %v1260
      %v1271 = vadd.f32 %v1089, %v1189
      %v1272 = vadd.f32 %v1090, %v1191
      %v1273 = vadd.f32 %v1091, %v1265
      %s1274 = scalar_lea.vmem %s1, 96
      %v1275 = vld [vmem:[%s1274] sm:$0xff]
      %v1276 = vld [vmem:[%s1274 + $0x8] sm:$0xff]
      %1277 = vrot.lane.b32.xlu0 %v206, 92
      %v1278 = vpop.permute.xlu0 %1277
      %1279 = vrot.lane.b32.xlu0 %v207, 92
      %v1280 = vpop.permute.xlu0 %1279
      %1281 = vrot.lane.b32.xlu0 %v208, 92
      %v1282 = vpop.permute.xlu0 %1281
      %1283 = vrot.lane.b32.xlu0 %v209, 92
      %v1284 = vpop.permute.xlu0 %1283
      %vm1285 = vcmask 752640
      %v1286 = vsel %vm1285, %v1278, %v1280
      %v1287 = vsel %vm1285, %v1280, %v1282
      %v1288 = vsel %vm1285, %v1282, %v1284
      %v1293 = vsel %vm229, %v1275, 0
      %v1296 = vsel %vm229, %v1276, 0
      %1298 = vmatprep.subr.mxu0 %v1287
      %1299 = vmatpush1.msra.mxu0 %v1286
      %1300 = vmatprep.subr.mxu0 0.0
      %1301 = vmatpush1.msra.mxu0 0.0
      %1302 = vmatprep.subr.mxu0 0.0
      %1303 = vmatpush1.msra.mxu0 0.0
      %1304 = vmatprep.subr.mxu0 0.0
      %1305 = vmatpush1.msra.mxu0 0.0
      %1306 = vmatprep.subr.mxu0 0.0
      %1307 = vmatpush1.msra.mxu0 0.0
      %1308 = vmatprep.subr.mxu0 0.0
      %1309 = vmatpush1.msra.mxu0 0.0
      %1310 = vmatprep.subr.mxu0 0.0
      %1311 = vmatpush1.msra.mxu0 0.0
      %1312 = vmatprep.subr.mxu0 0.0
      %1313 = vmatpush1.msra.mxu0 0.0
      %1314 = vmatprep.subr.mxu0 0.0
      %1315 = vmatpush1.msra.mxu0 0.0
      %1316 = vmatprep.subr.mxu0 0.0
      %1317 = vmatpush1.msra.mxu0 0.0
      %1318 = vmatprep.subr.mxu0 0.0
      %1319 = vmatpush1.msra.mxu0 0.0
      %1320 = vmatprep.subr.mxu0 0.0
      %1321 = vmatpush1.msra.mxu0 0.0
      %1322 = vmatprep.subr.mxu0 0.0
      %1323 = vmatpush1.msra.mxu0 0.0
      %1324 = vmatprep.subr.mxu0 0.0
      %1325 = vmatpush1.msra.mxu0 0.0
      %1326 = vmatprep.subr.mxu0 0.0
      %1327 = vmatpush1.msra.mxu0 0.0
      %1328 = vmatprep.subr.mxu0 0.0
      %1329 = vmatpush1.msra.mxu0 0.0
      %1330 = vmatprep.subr.mxu0 0.0
      %1331 = vmatpush1.msra.mxu0 0.0
      %1332 = vmatprep.subr.mxu0 0.0
      %1333 = vmatpush1.msra.mxu0 0.0
      %1334 = vmatprep.subr.mxu0 0.0
      %1335 = vmatpush1.msra.mxu0 0.0
      %1336 = vmatprep.subr.mxu0 0.0
      %1337 = vmatpush1.msra.mxu0 0.0
      %1338 = vmatprep.subr.mxu0 0.0
      %1339 = vmatpush1.msra.mxu0 0.0
      %1340 = vmatprep.subr.mxu0 0.0
      %1341 = vmatpush1.msra.mxu0 0.0
      %1342 = vmatprep.subr.mxu0 0.0
      %1343 = vmatpush1.msra.mxu0 0.0
      %1344 = vmatprep.subr.mxu0 0.0
      %1345 = vmatpush1.msra.mxu0 0.0
      %1346 = vmatprep.subr.mxu0 0.0
      %1347 = vmatpush1.msra.mxu0 0.0
      %1348 = vmatprep.subr.mxu0 0.0
      %1349 = vmatpush1.msra.mxu0 0.0
      %1350 = vmatprep.subr.mxu0 0.0
      %1351 = vmatpush1.msra.mxu0 0.0
      %1352 = vmatprep.subr.mxu0 0.0
      %1353 = vmatpush1.msra.mxu0 0.0
      %1354 = vmatprep.subr.mxu0 0.0
      %1355 = vmatpush1.msra.mxu0 0.0
      %1356 = vmatprep.subr.mxu0 0.0
      %1357 = vmatpush1.msra.mxu0 0.0
      %1358 = vmatprep.subr.mxu0 0.0
      %1359 = vmatpush1.msra.mxu0 0.0
      %1360 = vmatprep.subr.mxu0 0.0
      %1361 = vmatpush1.msra.mxu0 0.0
      %1362 = vmatprep.mubr.f32.mxu0 0.0
      %1363 = vmatmul.mubr.f32.gmra.mrb[0].mxu0 %v1293
      %v1364 = vpop.f32.mrb[0].mxu0
      %v1365 = vadd.f32 0.0, %v1364
      %v1366 = vpop.f32.mrb[0].mxu0
      %v1367 = vadd.f32 0.0, %v1366
      %1368 = vmatprep.mubr.f32.mxu0 0.0
      %1369 = vmatmul.mubr.f32.gmra.mrb[0].mxu0 %v1296
      %v1370 = vpop.f32.mrb[0].mxu0
      %v1371 = vadd.f32 0.0, %v1370
      %v1372 = vpop.f32.mrb[0].mxu0
      %v1373 = vadd.f32 0.0, %v1372
      %1374 = vdwg.mxu0
      %1375 = vmatprep.subr.mxu0 0.0
      %1376 = vmatpush1.msra.mxu0 %v1288
      %1377 = vmatprep.subr.mxu0 0.0
      %1378 = vmatpush1.msra.mxu0 0.0
      %1379 = vmatprep.subr.mxu0 0.0
      %1380 = vmatpush1.msra.mxu0 0.0
      %1381 = vmatprep.subr.mxu0 0.0
      %1382 = vmatpush1.msra.mxu0 0.0
      %1383 = vmatprep.subr.mxu0 0.0
      %1384 = vmatpush1.msra.mxu0 0.0
      %1385 = vmatprep.subr.mxu0 0.0
      %1386 = vmatpush1.msra.mxu0 0.0
      %1387 = vmatprep.subr.mxu0 0.0
      %1388 = vmatpush1.msra.mxu0 0.0
      %1389 = vmatprep.subr.mxu0 0.0
      %1390 = vmatpush1.msra.mxu0 0.0
      %1391 = vmatprep.subr.mxu0 0.0
      %1392 = vmatpush1.msra.mxu0 0.0
      %1393 = vmatprep.subr.mxu0 0.0
      %1394 = vmatpush1.msra.mxu0 0.0
      %1395 = vmatprep.subr.mxu0 0.0
      %1396 = vmatpush1.msra.mxu0 0.0
      %1397 = vmatprep.subr.mxu0 0.0
      %1398 = vmatpush1.msra.mxu0 0.0
      %1399 = vmatprep.subr.mxu0 0.0
      %1400 = vmatpush1.msra.mxu0 0.0
      %1401 = vmatprep.subr.mxu0 0.0
      %1402 = vmatpush1.msra.mxu0 0.0
      %1403 = vmatprep.subr.mxu0 0.0
      %1404 = vmatpush1.msra.mxu0 0.0
      %1405 = vmatprep.subr.mxu0 0.0
      %1406 = vmatpush1.msra.mxu0 0.0
      %1407 = vmatprep.subr.mxu0 0.0
      %1408 = vmatpush1.msra.mxu0 0.0
      %1409 = vmatprep.subr.mxu0 0.0
      %1410 = vmatpush1.msra.mxu0 0.0
      %1411 = vmatprep.subr.mxu0 0.0
      %1412 = vmatpush1.msra.mxu0 0.0
      %1413 = vmatprep.subr.mxu0 0.0
      %1414 = vmatpush1.msra.mxu0 0.0
      %1415 = vmatprep.subr.mxu0 0.0
      %1416 = vmatpush1.msra.mxu0 0.0
      %1417 = vmatprep.subr.mxu0 0.0
      %1418 = vmatpush1.msra.mxu0 0.0
      %1419 = vmatprep.subr.mxu0 0.0
      %1420 = vmatpush1.msra.mxu0 0.0
      %1421 = vmatprep.subr.mxu0 0.0
      %1422 = vmatpush1.msra.mxu0 0.0
      %1423 = vmatprep.subr.mxu0 0.0
      %1424 = vmatpush1.msra.mxu0 0.0
      %1425 = vmatprep.subr.mxu0 0.0
      %1426 = vmatpush1.msra.mxu0 0.0
      %1427 = vmatprep.subr.mxu0 0.0
      %1428 = vmatpush1.msra.mxu0 0.0
      %1429 = vmatprep.subr.mxu0 0.0
      %1430 = vmatpush1.msra.mxu0 0.0
      %1431 = vmatprep.subr.mxu0 0.0
      %1432 = vmatpush1.msra.mxu0 0.0
      %1433 = vmatprep.subr.mxu0 0.0
      %1434 = vmatpush1.msra.mxu0 0.0
      %1435 = vmatprep.subr.mxu0 0.0
      %1436 = vmatpush1.msra.mxu0 0.0
      %1437 = vmatprep.subr.mxu0 0.0
      %1438 = vmatpush1.msra.mxu0 0.0
      %1439 = vmatprep.mubr.f32.mxu0 0.0
      %1440 = vmatmul.mubr.f32.gmra.mrb[0].mxu0 %v1293
      %v1441 = vpop.f32.mrb[0].mxu0
      %v1442 = vadd.f32 0.0, %v1441
      %v1443 = vpop.f32.mrb[0].mxu0
      %1444 = vmatprep.mubr.f32.mxu0 0.0
      %1445 = vmatmul.mubr.f32.gmra.mrb[0].mxu0 %v1296
      %v1446 = vpop.f32.mrb[0].mxu0
      %v1447 = vadd.f32 0.0, %v1446
      %v1448 = vpop.f32.mrb[0].mxu0
      %1449 = vdwg.mxu0
      %v1450 = vadd.f32 %v1268, %v1365
      %v1451 = vadd.f32 %v1269, %v1367
      %v1452 = vadd.f32 %v1270, %v1442
      %v1453 = vadd.f32 %v1271, %v1371
      %v1454 = vadd.f32 %v1272, %v1373
      %v1455 = vadd.f32 %v1273, %v1447
      %s1456 = scalar_lea.vmem %s1, 112
      %v1457 = vld [vmem:[%s1456] sm:$0xff]
      %v1458 = vld [vmem:[%s1456 + $0x8] sm:$0xff]
      %1459 = vrot.lane.b32.xlu0 %v206, 91
      %v1460 = vpop.permute.xlu0 %1459
      %1461 = vrot.lane.b32.xlu0 %v207, 91
      %v1462 = vpop.permute.xlu0 %1461
      %1463 = vrot.lane.b32.xlu0 %v208, 91
      %v1464 = vpop.permute.xlu0 %1463
      %1465 = vrot.lane.b32.xlu0 %v209, 91
      %v1466 = vpop.permute.xlu0 %1465
      %vm1467 = vcmask 744448
      %v1468 = vsel %vm1467, %v1460, %v1462
      %v1469 = vsel %vm1467, %v1462, %v1464
      %v1470 = vsel %vm1467, %v1464, %v1466
      %v1475 = vsel %vm229, %v1457, 0
      %v1478 = vsel %vm229, %v1458, 0
      %1480 = vmatprep.subr.mxu0 %v1469
      %1481 = vmatpush1.msra.mxu0 %v1468
      %1482 = vmatprep.subr.mxu0 0.0
      %1483 = vmatpush1.msra.mxu0 0.0
      %1484 = vmatprep.subr.mxu0 0.0
      %1485 = vmatpush1.msra.mxu0 0.0
      %1486 = vmatprep.subr.mxu0 0.0
      %1487 = vmatpush1.msra.mxu0 0.0
      %1488 = vmatprep.subr.mxu0 0.0
      %1489 = vmatpush1.msra.mxu0 0.0
      %1490 = vmatprep.subr.mxu0 0.0
      %1491 = vmatpush1.msra.mxu0 0.0
      %1492 = vmatprep.subr.mxu0 0.0
      %1493 = vmatpush1.msra.mxu0 0.0
      %1494 = vmatprep.subr.mxu0 0.0
      %1495 = vmatpush1.msra.mxu0 0.0
      %1496 = vmatprep.subr.mxu0 0.0
      %1497 = vmatpush1.msra.mxu0 0.0
      %1498 = vmatprep.subr.mxu0 0.0
      %1499 = vmatpush1.msra.mxu0 0.0
      %1500 = vmatprep.subr.mxu0 0.0
      %1501 = vmatpush1.msra.mxu0 0.0
      %1502 = vmatprep.subr.mxu0 0.0
      %1503 = vmatpush1.msra.mxu0 0.0
      %1504 = vmatprep.subr.mxu0 0.0
      %1505 = vmatpush1.msra.mxu0 0.0
      %1506 = vmatprep.subr.mxu0 0.0
      %1507 = vmatpush1.msra.mxu0 0.0
      %1508 = vmatprep.subr.mxu0 0.0
      %1509 = vmatpush1.msra.mxu0 0.0
      %1510 = vmatprep.subr.mxu0 0.0
      %1511 = vmatpush1.msra.mxu0 0.0
      %1512 = vmatprep.subr.mxu0 0.0
      %1513 = vmatpush1.msra.mxu0 0.0
      %1514 = vmatprep.subr.mxu0 0.0
      %1515 = vmatpush1.msra.mxu0 0.0
      %1516 = vmatprep.subr.mxu0 0.0
      %1517 = vmatpush1.msra.mxu0 0.0
      %1518 = vmatprep.subr.mxu0 0.0
      %1519 = vmatpush1.msra.mxu0 0.0
      %1520 = vmatprep.subr.mxu0 0.0
      %1521 = vmatpush1.msra.mxu0 0.0
      %1522 = vmatprep.subr.mxu0 0.0
      %1523 = vmatpush1.msra.mxu0 0.0
      %1524 = vmatprep.subr.mxu0 0.0
      %1525 = vmatpush1.msra.mxu0 0.0
      %1526 = vmatprep.subr.mxu0 0.0
      %1527 = vmatpush1.msra.mxu0 0.0
      %1528 = vmatprep.subr.mxu0 0.0
      %1529 = vmatpush1.msra.mxu0 0.0
      %1530 = vmatprep.subr.mxu0 0.0
      %1531 = vmatpush1.msra.mxu0 0.0
      %1532 = vmatprep.subr.mxu0 0.0
      %1533 = vmatpush1.msra.mxu0 0.0
      %1534 = vmatprep.subr.mxu0 0.0
      %1535 = vmatpush1.msra.mxu0 0.0
      %1536 = vmatprep.subr.mxu0 0.0
      %1537 = vmatpush1.msra.mxu0 0.0
      %1538 = vmatprep.subr.mxu0 0.0
      %1539 = vmatpush1.msra.mxu0 0.0
      %1540 = vmatprep.subr.mxu0 0.0
      %1541 = vmatpush1.msra.mxu0 0.0
      %1542 = vmatprep.subr.mxu0 0.0
      %1543 = vmatpush1.msra.mxu0 0.0
      %1544 = vmatprep.mubr.f32.mxu0 0.0
      %1545 = vmatmul.mubr.f32.gmra.mrb[0].mxu0 %v1475
      %v1546 = vpop.f32.mrb[0].mxu0
      %v1547 = vadd.f32 0.0, %v1546
      %v1548 = vpop.f32.mrb[0].mxu0
      %v1549 = vadd.f32 0.0, %v1548
      %1550 = vmatprep.mubr.f32.mxu0 0.0
      %1551 = vmatmul.mubr.f32.gmra.mrb[0].mxu0 %v1478
      %v1552 = vpop.f32.mrb[0].mxu0
      %v1553 = vadd.f32 0.0, %v1552
      %v1554 = vpop.f32.mrb[0].mxu0
      %v1555 = vadd.f32 0.0, %v1554
      %1556 = vdwg.mxu0
      %1557 = vmatprep.subr.mxu0 0.0
      %1558 = vmatpush1.msra.mxu0 %v1470
      %1559 = vmatprep.subr.mxu0 0.0
      %1560 = vmatpush1.msra.mxu0 0.0
      %1561 = vmatprep.subr.mxu0 0.0
      %1562 = vmatpush1.msra.mxu0 0.0
      %1563 = vmatprep.subr.mxu0 0.0
      %1564 = vmatpush1.msra.mxu0 0.0
      %1565 = vmatprep.subr.mxu0 0.0
      %1566 = vmatpush1.msra.mxu0 0.0
      %1567 = vmatprep.subr.mxu0 0.0
      %1568 = vmatpush1.msra.mxu0 0.0
      %1569 = vmatprep.subr.mxu0 0.0
      %1570 = vmatpush1.msra.mxu0 0.0
      %1571 = vmatprep.subr.mxu0 0.0
      %1572 = vmatpush1.msra.mxu0 0.0
      %1573 = vmatprep.subr.mxu0 0.0
      %1574 = vmatpush1.msra.mxu0 0.0
      %1575 = vmatprep.subr.mxu0 0.0
      %1576 = vmatpush1.msra.mxu0 0.0
      %1577 = vmatprep.subr.mxu0 0.0
      %1578 = vmatpush1.msra.mxu0 0.0
      %1579 = vmatprep.subr.mxu0 0.0
      %1580 = vmatpush1.msra.mxu0 0.0
      %1581 = vmatprep.subr.mxu0 0.0
      %1582 = vmatpush1.msra.mxu0 0.0
      %1583 = vmatprep.subr.mxu0 0.0
      %1584 = vmatpush1.msra.mxu0 0.0
      %1585 = vmatprep.subr.mxu0 0.0
      %1586 = vmatpush1.msra.mxu0 0.0
      %1587 = vmatprep.subr.mxu0 0.0
      %1588 = vmatpush1.msra.mxu0 0.0
      %1589 = vmatprep.subr.mxu0 0.0
      %1590 = vmatpush1.msra.mxu0 0.0
      %1591 = vmatprep.subr.mxu0 0.0
      %1592 = vmatpush1.msra.mxu0 0.0
      %1593 = vmatprep.subr.mxu0 0.0
      %1594 = vmatpush1.msra.mxu0 0.0
      %1595 = vmatprep.subr.mxu0 0.0
      %1596 = vmatpush1.msra.mxu0 0.0
      %1597 = vmatprep.subr.mxu0 0.0
      %1598 = vmatpush1.msra.mxu0 0.0
      %1599 = vmatprep.subr.mxu0 0.0
      %1600 = vmatpush1.msra.mxu0 0.0
      %1601 = vmatprep.subr.mxu0 0.0
      %1602 = vmatpush1.msra.mxu0 0.0
      %1603 = vmatprep.subr.mxu0 0.0
      %1604 = vmatpush1.msra.mxu0 0.0
      %1605 = vmatprep.subr.mxu0 0.0
      %1606 = vmatpush1.msra.mxu0 0.0
      %1607 = vmatprep.subr.mxu0 0.0
      %1608 = vmatpush1.msra.mxu0 0.0
      %1609 = vmatprep.subr.mxu0 0.0
      %1610 = vmatpush1.msra.mxu0 0.0
      %1611 = vmatprep.subr.mxu0 0.0
      %1612 = vmatpush1.msra.mxu0 0.0
      %1613 = vmatprep.subr.mxu0 0.0
      %1614 = vmatpush1.msra.mxu0 0.0
      %1615 = vmatprep.subr.mxu0 0.0
      %1616 = vmatpush1.msra.mxu0 0.0
      %1617 = vmatprep.subr.mxu0 0.0
      %1618 = vmatpush1.msra.mxu0 0.0
      %1619 = vmatprep.subr.mxu0 0.0
      %1620 = vmatpush1.msra.mxu0 0.0
      %1621 = vmatprep.mubr.f32.mxu0 0.0
      %1622 = vmatmul.mubr.f32.gmra.mrb[0].mxu0 %v1475
      %v1623 = vpop.f32.mrb[0].mxu0
      %v1624 = vadd.f32 0.0, %v1623
      %v1625 = vpop.f32.mrb[0].mxu0
      %1626 = vmatprep.mubr.f32.mxu0 0.0
      %1627 = vmatmul.mubr.f32.gmra.mrb[0].mxu0 %v1478
      %v1628 = vpop.f32.mrb[0].mxu0
      %v1629 = vadd.f32 0.0, %v1628
      %v1630 = vpop.f32.mrb[0].mxu0
      %1631 = vdwg.mxu0
      %v1632 = vadd.f32 %v1450, %v1547
      %v1633 = vadd.f32 %v1451, %v1549
      %v1634 = vadd.f32 %v1452, %v1624
      %v1635 = vadd.f32 %v1453, %v1553
      %v1636 = vadd.f32 %v1454, %v1555
      %v1637 = vadd.f32 %v1455, %v1629
      %s1638 = scalar_lea.vmem %s1, 128
      %v1639 = vld [vmem:[%s1638] sm:$0xff]
      %v1640 = vld [vmem:[%s1638 + $0x8] sm:$0xff]
      %1641 = vrot.lane.b32.xlu0 %v206, 90
      %v1642 = vpop.permute.xlu0 %1641
      %1643 = vrot.lane.b32.xlu0 %v207, 90
      %v1644 = vpop.permute.xlu0 %1643
      %1645 = vrot.lane.b32.xlu0 %v208, 90
      %v1646 = vpop.permute.xlu0 %1645
      %1647 = vrot.lane.b32.xlu0 %v209, 90
      %v1648 = vpop.permute.xlu0 %1647
      %vm1649 = vcmask 736256
      %v1650 = vsel %vm1649, %v1642, %v1644
      %v1651 = vsel %vm1649, %v1644, %v1646
      %v1652 = vsel %vm1649, %v1646, %v1648
      %v1657 = vsel %vm229, %v1639, 0
      %v1660 = vsel %vm229, %v1640, 0
      %1662 = vmatprep.subr.mxu0 %v1651
      %1663 = vmatpush1.msra.mxu0 %v1650
      %1664 = vmatprep.subr.mxu0 0.0
      %1665 = vmatpush1.msra.mxu0 0.0
      %1666 = vmatprep.subr.mxu0 0.0
      %1667 = vmatpush1.msra.mxu0 0.0
      %1668 = vmatprep.subr.mxu0 0.0
      %1669 = vmatpush1.msra.mxu0 0.0
      %1670 = vmatprep.subr.mxu0 0.0
      %1671 = vmatpush1.msra.mxu0 0.0
      %1672 = vmatprep.subr.mxu0 0.0
      %1673 = vmatpush1.msra.mxu0 0.0
      %1674 = vmatprep.subr.mxu0 0.0
      %1675 = vmatpush1.msra.mxu0 0.0
      %1676 = vmatprep.subr.mxu0 0.0
      %1677 = vmatpush1.msra.mxu0 0.0
      %1678 = vmatprep.subr.mxu0 0.0
      %1679 = vmatpush1.msra.mxu0 0.0
      %1680 = vmatprep.subr.mxu0 0.0
      %1681 = vmatpush1.msra.mxu0 0.0
      %1682 = vmatprep.subr.mxu0 0.0
      %1683 = vmatpush1.msra.mxu0 0.0
      %1684 = vmatprep.subr.mxu0 0.0
      %1685 = vmatpush1.msra.mxu0 0.0
      %1686 = vmatprep.subr.mxu0 0.0
      %1687 = vmatpush1.msra.mxu0 0.0
      %1688 = vmatprep.subr.mxu0 0.0
      %1689 = vmatpush1.msra.mxu0 0.0
      %1690 = vmatprep.subr.mxu0 0.0
      %1691 = vmatpush1.msra.mxu0 0.0
      %1692 = vmatprep.subr.mxu0 0.0
      %1693 = vmatpush1.msra.mxu0 0.0
      %1694 = vmatprep.subr.mxu0 0.0
      %1695 = vmatpush1.msra.mxu0 0.0
      %1696 = vmatprep.subr.mxu0 0.0
      %1697 = vmatpush1.msra.mxu0 0.0
      %1698 = vmatprep.subr.mxu0 0.0
      %1699 = vmatpush1.msra.mxu0 0.0
      %1700 = vmatprep.subr.mxu0 0.0
      %1701 = vmatpush1.msra.mxu0 0.0
      %1702 = vmatprep.subr.mxu0 0.0
      %1703 = vmatpush1.msra.mxu0 0.0
      %1704 = vmatprep.subr.mxu0 0.0
      %1705 = vmatpush1.msra.mxu0 0.0
      %1706 = vmatprep.subr.mxu0 0.0
      %1707 = vmatpush1.msra.mxu0 0.0
      %1708 = vmatprep.subr.mxu0 0.0
      %1709 = vmatpush1.msra.mxu0 0.0
      %1710 = vmatprep.subr.mxu0 0.0
      %1711 = vmatpush1.msra.mxu0 0.0
      %1712 = vmatprep.subr.mxu0 0.0
      %1713 = vmatpush1.msra.mxu0 0.0
      %1714 = vmatprep.subr.mxu0 0.0
      %1715 = vmatpush1.msra.mxu0 0.0
      %1716 = vmatprep.subr.mxu0 0.0
      %1717 = vmatpush1.msra.mxu0 0.0
      %1718 = vmatprep.subr.mxu0 0.0
      %1719 = vmatpush1.msra.mxu0 0.0
      %1720 = vmatprep.subr.mxu0 0.0
      %1721 = vmatpush1.msra.mxu0 0.0
      %1722 = vmatprep.subr.mxu0 0.0
      %1723 = vmatpush1.msra.mxu0 0.0
      %1724 = vmatprep.subr.mxu0 0.0
      %1725 = vmatpush1.msra.mxu0 0.0
      %1726 = vmatprep.mubr.f32.mxu0 0.0
      %1727 = vmatmul.mubr.f32.gmra.mrb[0].mxu0 %v1657
      %v1728 = vpop.f32.mrb[0].mxu0
      %v1729 = vadd.f32 0.0, %v1728
      %v1730 = vpop.f32.mrb[0].mxu0
      %v1731 = vadd.f32 0.0, %v1730
      %1732 = vmatprep.mubr.f32.mxu0 0.0
      %1733 = vmatmul.mubr.f32.gmra.mrb[0].mxu0 %v1660
      %v1734 = vpop.f32.mrb[0].mxu0
      %v1735 = vadd.f32 0.0, %v1734
      %v1736 = vpop.f32.mrb[0].mxu0
      %v1737 = vadd.f32 0.0, %v1736
      %1738 = vdwg.mxu0
      %1739 = vmatprep.subr.mxu0 0.0
      %1740 = vmatpush1.msra.mxu0 %v1652
      %1741 = vmatprep.subr.mxu0 0.0
      %1742 = vmatpush1.msra.mxu0 0.0
      %1743 = vmatprep.subr.mxu0 0.0
      %1744 = vmatpush1.msra.mxu0 0.0
      %1745 = vmatprep.subr.mxu0 0.0
      %1746 = vmatpush1.msra.mxu0 0.0
      %1747 = vmatprep.subr.mxu0 0.0
      %1748 = vmatpush1.msra.mxu0 0.0
      %1749 = vmatprep.subr.mxu0 0.0
      %1750 = vmatpush1.msra.mxu0 0.0
      %1751 = vmatprep.subr.mxu0 0.0
      %1752 = vmatpush1.msra.mxu0 0.0
      %1753 = vmatprep.subr.mxu0 0.0
      %1754 = vmatpush1.msra.mxu0 0.0
      %1755 = vmatprep.subr.mxu0 0.0
      %1756 = vmatpush1.msra.mxu0 0.0
      %1757 = vmatprep.subr.mxu0 0.0
      %1758 = vmatpush1.msra.mxu0 0.0
      %1759 = vmatprep.subr.mxu0 0.0
      %1760 = vmatpush1.msra.mxu0 0.0
      %1761 = vmatprep.subr.mxu0 0.0
      %1762 = vmatpush1.msra.mxu0 0.0
      %1763 = vmatprep.subr.mxu0 0.0
      %1764 = vmatpush1.msra.mxu0 0.0
      %1765 = vmatprep.subr.mxu0 0.0
      %1766 = vmatpush1.msra.mxu0 0.0
      %1767 = vmatprep.subr.mxu0 0.0
      %1768 = vmatpush1.msra.mxu0 0.0
      %1769 = vmatprep.subr.mxu0 0.0
      %1770 = vmatpush1.msra.mxu0 0.0
      %1771 = vmatprep.subr.mxu0 0.0
      %1772 = vmatpush1.msra.mxu0 0.0
      %1773 = vmatprep.subr.mxu0 0.0
      %1774 = vmatpush1.msra.mxu0 0.0
      %1775 = vmatprep.subr.mxu0 0.0
      %1776 = vmatpush1.msra.mxu0 0.0
      %1777 = vmatprep.subr.mxu0 0.0
      %1778 = vmatpush1.msra.mxu0 0.0
      %1779 = vmatprep.subr.mxu0 0.0
      %1780 = vmatpush1.msra.mxu0 0.0
      %1781 = vmatprep.subr.mxu0 0.0
      %1782 = vmatpush1.msra.mxu0 0.0
      %1783 = vmatprep.subr.mxu0 0.0
      %1784 = vmatpush1.msra.mxu0 0.0
      %1785 = vmatprep.subr.mxu0 0.0
      %1786 = vmatpush1.msra.mxu0 0.0
      %1787 = vmatprep.subr.mxu0 0.0
      %1788 = vmatpush1.msra.mxu0 0.0
      %1789 = vmatprep.subr.mxu0 0.0
      %1790 = vmatpush1.msra.mxu0 0.0
      %1791 = vmatprep.subr.mxu0 0.0
      %1792 = vmatpush1.msra.mxu0 0.0
      %1793 = vmatprep.subr.mxu0 0.0
      %1794 = vmatpush1.msra.mxu0 0.0
      %1795 = vmatprep.subr.mxu0 0.0
      %1796 = vmatpush1.msra.mxu0 0.0
      %1797 = vmatprep.subr.mxu0 0.0
      %1798 = vmatpush1.msra.mxu0 0.0
      %1799 = vmatprep.subr.mxu0 0.0
      %1800 = vmatpush1.msra.mxu0 0.0
      %1801 = vmatprep.subr.mxu0 0.0
      %1802 = vmatpush1.msra.mxu0 0.0
      %1803 = vmatprep.mubr.f32.mxu0 0.0
      %1804 = vmatmul.mubr.f32.gmra.mrb[0].mxu0 %v1657
      %v1805 = vpop.f32.mrb[0].mxu0
      %v1806 = vadd.f32 0.0, %v1805
      %v1807 = vpop.f32.mrb[0].mxu0
      %1808 = vmatprep.mubr.f32.mxu0 0.0
      %1809 = vmatmul.mubr.f32.gmra.mrb[0].mxu0 %v1660
      %v1810 = vpop.f32.mrb[0].mxu0
      %v1811 = vadd.f32 0.0, %v1810
      %v1812 = vpop.f32.mrb[0].mxu0
      %1813 = vdwg.mxu0
      %v1814 = vadd.f32 %v1632, %v1729
      %v1815 = vadd.f32 %v1633, %v1731
      %v1816 = vadd.f32 %v1634, %v1806
      %v1817 = vadd.f32 %v1635, %v1735
      %v1818 = vadd.f32 %v1636, %v1737
      %v1819 = vadd.f32 %v1637, %v1811
      %v1820 = vld [vmem:[%s2] sm:$0xff]
      %v1821 = vld [vmem:[%s2 + $0x8] sm:$0xff]
      %1823 = vset.pattern.permute.xlu0 0
      %1824 = vperm.xlu0 %1823, %v1820
      %v1825 = vpop.permute.xlu0 %1824
      %1828 = vset.pattern.permute.xlu0 0
      %1829 = vperm.xlu0 %1828, %v1821
      %v1830 = vpop.permute.xlu0 %1829
      %v1832 = vadd.f32 %v1814, %v1825
      %v1833 = vadd.f32 %v1815, %v1825
      %v1834 = vadd.f32 %v1816, %v1825
      %v1835 = vadd.f32 %v1817, %v1830
      %v1836 = vadd.f32 %v1818, %v1830
      %v1837 = vadd.f32 %v1819, %v1830
      %1839 = vrot.lane.b32.xlu0 0.0, 109
      %v1840 = vpop.permute.xlu0 %1839
      %v1842 = vadd.f32 %v1832, %v922
      %v1843 = vadd.f32 %v1833, %v923
      %v1844 = vadd.f32 %v1834, %v924
      %v1845 = vadd.f32 %v1835, %v1840
      %v1846 = vadd.f32 %v1836, %v1840
      %v1847 = vadd.f32 %v1837, %v1840
      %v1848 = vmax.f32 %v1842, 0.0
      %v1849 = vmax.f32 %v1843, 0.0
      %v1850 = vmax.f32 %v1844, 0.0
      %v1851 = vmax.f32 %v1845, 0.0
      %v1852 = vmax.f32 %v1846, 0.0
      %v1853 = vmax.f32 %v1847, 0.0
      %v1854 = vld [vmem:[%s3] sm:$0x7]
      %v1856 = vlaneseq
      %v1857 = vshrl.u32 %v1856, 7
      %v1858 = vsub.s32 0, %v1857
      %v1859 = vrot.slane %v1854, %v1858
      %v1860 = vlaneseq
      %v1861 = vshrl.u32 %v1860, 7
      %v1862 = vsub.s32 1, %v1861
      %v1863 = vrot.slane %v1854, %v1862
      %v1864 = vlaneseq
      %v1865 = vshrl.u32 %v1864, 7
      %v1866 = vsub.s32 2, %v1865
      %v1867 = vrot.slane %v1854, %v1866
      %v1871 = vmul.f32 %v1848, %v1859
      %v1872 = vmul.f32 %v1849, %v1863
      %v1873 = vmul.f32 %v1850, %v1867
      %v1874 = vmul.f32 %v1851, %v1859
      %v1875 = vmul.f32 %v1852, %v1863
      %v1876 = vmul.f32 %v1853, %v1867
      %1877 = vst [vmem:[%s197] sm:$0xff] %v1871
      %1878 = vst [vmem:[%s197 + $0x8] sm:$0xff] %v1872
      %1879 = vst [vmem:[%s197 + $0x10] sm:$0xff] %v1873
      %1880 = vst [vmem:[%s197 + $0x18] sm:$0xff] %v1874
      %1881 = vst [vmem:[%s197 + $0x20] sm:$0xff] %v1875
      %1882 = vst [vmem:[%s197 + $0x28] sm:$0xff] %v1876
      %p1883 = scmp.lt.s32.totalorder %s15, 1
      %s1884 = scalar_select %p1883, %s15, 1
      %s1885 = smul.addr %s1884, 6
      %s1886 = smul.addr %s1885, 8
      %s1887 = scalar_lea.vmem %s4, %s1886
      // Predicated region
      $region37: #{blaze_block_forward.1} parent=35 // pred_check
        %p1888 = pneg %p122
      $region38: #{blaze_block_forward.1} parent=35 // pred_check_branch
        %1890 = sbr.rel (%p1888) target = $region40
      $region39: #{blaze_block_forward.1} parent=35 // pred_region
        _
      $region40: #{blaze_block_forward.1} parent=35 // pred_fallthru
        _
    $region36: #{blaze_block_forward.1} parent=5 // pred_fallthru
      _
    %p1891 = scmp.le.s32.totalorder 2, %s10
    // Predicated region
    $region41: #{blaze_block_forward.1} parent=5 // pred_check
      %p1892 = pneg %p1891
    $region42: #{blaze_block_forward.1} parent=5 // pred_check_branch
      %1894 = sbr.rel (%p1892) target = $region44
    $region43: #{blaze_block_forward.1} parent=5 // pred_region
      %s1895 = ssub.s32 %s10, 2
      // Predicated region
      $region45: #{blaze_block_forward.1} parent=43 // pred_check
        %p1896 = pneg %p128
      $region46: #{blaze_block_forward.1} parent=43 // pred_check_branch
        %1898 = sbr.rel (%p1896) target = $region48
      $region47: #{blaze_block_forward.1} parent=43 // pred_region
        %p1899 = scmp.lt.s32.totalorder %s16, 1
        %s1900 = scalar_select %p1899, %s16, 1
        %s1901 = smul.addr %s1900, 6
        %s1902 = smul.addr %s1901, 8
        %s1903 = scalar_lea.vmem %s4, %s1902
      $region48: #{blaze_block_forward.1} parent=43 // pred_fallthru
        _
    $region44: #{blaze_block_forward.1} parent=5 // pred_fallthru
      _
  $region6: #{blaze_block_forward.1} parent=0 // loop_footer
    %s14 = sadd.s32 1, %s10
  $region7: #{blaze_block_forward.1} parent=0 // loop_footer_branch
    %9 = sbr.rel target = $region3
  $region8: #{blaze_block_forward.1} parent=0 // loop_exit
    _

</llo_original>
